<compile_context>
chip_gen: v7x
topology: tpu7x:2x2x1
jax: 0.10.0
libtpu: 0.0.40
codegen_flags: <defaults>
</compile_context>

<pallas_src>
import jax
import jax.numpy as jnp
from jax import lax
from jax.experimental import pallas as pl
from jax.experimental.pallas import tpu as pltpu


# --------------------------------------------------------------------------- #
# Helpers
# --------------------------------------------------------------------------- #
def _round_up(x: int, m: int) -> int:
    return ((x + m - 1) // m) * m


def _tpu_info():
    """Best-effort device-kind / VMEM-capacity query (safe fallbacks)."""
    try:
        kind = jax.devices()[0].device_kind.lower()
    except Exception:
        kind = ""
    try:
        vmem_cap = int(getattr(pltpu.get_tpu_info(), "vmem_capacity_bytes",
                               128 << 20))
    except Exception:
        vmem_cap = 128 << 20
    return kind, vmem_cap


def _select_config(kind: str, vmem_cap: int):
    """Generation-aware (tm, ti) preferences and a VMEM budget for buffers."""
    is_v7 = ("v7" in kind) or (vmem_cap <= (64 << 20))
    if is_v7:
        # ~996 TF/s vs ~3.2 TB/s per TC -> need tm >~ 320; only 64 MiB VMEM.
        tm_pref, ti_pref = 512, 512
        budget = min(vmem_cap - (12 << 20), 52 << 20)
    elif "v6" in kind:
        # ~918 TF/s vs ~1.35 TB/s -> need tm >~ 680 to be MXU-bound.
        tm_pref, ti_pref = 768, 512
        budget = 100 << 20
    elif "v5 lite" in kind or "v5e" in kind or "v5litepod" in kind:
        # ~197 TF/s vs ~0.82 TB/s -> tm=256 already clears the roofline.
        tm_pref, ti_pref = 256, 512
        budget = 100 << 20
    else:
        # Unknown part: roofline-safe middle ground.
        tm_pref, ti_pref = 512, 512
        budget = max(32 << 20, min(100 << 20, int(vmem_cap * 0.78)))
    return tm_pref, ti_pref, int(budget), is_v7


def prepare_arcee_weights(w_up, w_down, compute_dtype=jnp.bfloat16):
    """One-time (model-load-time) weight preprocessing.

    w_up:   [I, H] PyTorch up_proj.weight   -> cast to compute_dtype.
    w_down: [H, I] PyTorch down_proj.weight -> cast + re-laid out to [I, H] so
            the streamed weight DMA is a contiguous row slab and the second
            matmul runs in native orientation on the MXU.

    Do this once at load; per-call casts/transposes would add a full extra HBM
    pass over the weights before the kernel even starts.
    """
    I, H = w_up.shape
    assert w_down.shape == (H, I)
    w_up_c = jax.block_until_ready(jnp.asarray(w_up).astype(compute_dtype))
    w_down_t = jax.block_until_ready(
        jnp.transpose(jnp.asarray(w_down)).astype(compute_dtype))
    return w_up_c, w_down_t


# --------------------------------------------------------------------------- #
# Kernels
# --------------------------------------------------------------------------- #
def _arcee_mlp_stream_kernel(x_ref, wu_ref, wdt_ref, o_ref, acc_ref):
    """Streaming path: grid = (token tiles, I tiles).

    x_ref:   (tm, H)  token tile (compute dtype)
    wu_ref:  (ti, H)  up_proj slab    (PyTorch [I, H] layout, I-sliced)
    wdt_ref: (ti, H)  down_proj slab  (pre-relaid [I, H] layout, I-sliced)
    o_ref:   (tm, H)  output tile
    acc_ref: (tm, H)  resident f32 accumulator across the I grid axis
    """
    k = pl.program_id(1)

    # h = x @ W_up_slab.T -> (tm, ti); f32 accumulation on the MXU.
    h = lax.dot_general(x_ref[...], wu_ref[...],
                        dimension_numbers=(((1,), (1,)), ((), ())),
                        preferred_element_type=jnp.float32)
    # ReLU^2 on the VPU in f32, single downcast for the second matmul.
    h = jnp.square(jnp.maximum(h, 0.0)).astype(wdt_ref.dtype)
    # Partial y = h @ W_down_slab (native (K-major) orientation) -> (tm, H).
    part = lax.dot_general(h, wdt_ref[...],
                           dimension_numbers=(((1,), (0,)), ((), ())),
                           preferred_element_type=jnp.float32)

    @pl.when(k == 0)
    def _():
        acc_ref[...] = part            # first slab: store directly (no zero fill)

    @pl.when(k > 0)
    def _():
        acc_ref[...] += part

    @pl.when(k == pl.num_programs(1) - 1)
    def _():
        o_ref[...] = acc_ref[...].astype(o_ref.dtype)


def _arcee_mlp_fused_kernel(x_ref, wu_ref, wdt_ref, o_ref):
    """Fused path: full weights resident in VMEM, grid = (token tiles,)."""
    h = lax.dot_general(x_ref[...], wu_ref[...],
                        dimension_numbers=(((1,), (1,)), ((), ())),
                        preferred_element_type=jnp.float32)
    h = jnp.square(jnp.maximum(h, 0.0)).astype(wdt_ref.dtype)
    o_ref[...] = lax.dot_general(
        h, wdt_ref[...],
        dimension_numbers=(((1,), (0,)), ((), ())),
        preferred_element_type=jnp.float32).astype(o_ref.dtype)


# --------------------------------------------------------------------------- #
# Wrapper
# --------------------------------------------------------------------------- #
def arcee_mlp(x, w_up_c, w_down_t, *, tm=None, ti=None, fuse_weights=None):
    """ArceeMLP forward: relu(x @ W_up.T)**2 @ W_down.T.

    x:        [T, H] activations.
    w_up_c:   [I, H] up_proj weight in compute dtype (prepare_arcee_weights).
    w_down_t: [I, H] down_proj weight, re-laid out from PyTorch's [H, I]
              (prepare_arcee_weights).
    Returns [T, H] in x.dtype.
    """
    T, H = x.shape
    I = w_up_c.shape[0]
    assert w_up_c.shape == (I, H), w_up_c.shape
    assert w_down_t.shape == (I, H), w_down_t.shape

    out_dtype = x.dtype
    compute_dtype = w_up_c.dtype
    bpe = jnp.dtype(compute_dtype).itemsize
    out_bpe = jnp.dtype(out_dtype).itemsize

    kind, vmem_cap = _tpu_info()
    tm_pref, ti_pref, budget, is_v7 = _select_config(kind, vmem_cap)

    # ---- token tile: multiple of 16 (bf16 sublane packing), clipped to T ----
    tm_sel = tm if tm is not None else tm_pref
    tm_sel = max(16, min(_round_up(tm_sel, 16), _round_up(T, 16)))

    # ---- intermediate tile: >= 512 where possible, lane-aligned, divides I --
    ti_sel = ti if ti is not None else ti_pref
    ti_sel = max(128, min(ti_sel, I))
    while ti_sel > 128 and I % ti_sel != 0:
        ti_sel -= 128
    if I % ti_sel != 0:
        ti_sel = I                      # ragged intermediate: one slab

    # ---- fused (weights-resident) fast-path decision -------------------------
    weight_bytes = 2 * I * H * bpe      # both matrices, single copy
    fused_buf = (2 * weight_bytes                       # allow 2x buffer alloc
                 + 2 * tm_sel * H * (bpe + out_bpe)     # x / out tiles
                 + tm_sel * I * 6)                      # h f32 + bf16 copy
    if fuse_weights is None:
        fuse_weights = fused_buf + (4 << 20) <= budget

    def _stream_buf(tm_v, ti_v):
        return (2 * tm_v * H * bpe          # x tiles (double-buffered)
                + 4 * ti_v * H * bpe        # W_up + W_down slabs (2x each)
                + 2 * tm_v * H * out_bpe    # out tiles
                + tm_v * H * 4              # resident f32 accumulator
                + tm_v * ti_v * 6)          # h f32 + bf16 copy

    if not fuse_weights:
        # Shrink tm until the streaming tile set fits the per-part budget.
        while _stream_buf(tm_sel, ti_sel) + (4 << 20) > budget and tm_sel > 256:
            tm_sel = max(256, tm_sel - 128)

    # Keep both v7x TensorCores busy: token axis is the "parallel" grid axis.
    n_t = pl.cdiv(T, tm_sel)
    if is_v7 and tm is None and n_t > 1 and n_t % 2 == 1:
        tm_sel = max(16, _round_up(pl.cdiv(T, n_t + 1), 16))
        n_t = pl.cdiv(T, tm_sel)
    T_pad = n_t * tm_sel

    if T_pad != T:
        x = jnp.pad(x, ((0, T_pad - T), (0, 0)))    # zero rows are inert
    xc = x.astype(compute_dtype)                    # cheap per-call activation cast

    flops = 4 * T_pad * H * I                       # two matmuls, 2*T*H*I each

    if fuse_weights:
        vmem_limit = int(max(min(fused_buf + (6 << 20), vmem_cap - (12 << 20)),
                             16 << 20))
        bytes_accessed = int(xc.size * bpe + weight_bytes + T_pad * H * out_bpe)
        out = pl.pallas_call(
            _arcee_mlp_fused_kernel,
            out_shape=jax.ShapeDtypeStruct((T_pad, H), out_dtype),
            grid_spec=pltpu.PrefetchScalarGridSpec(
                num_scalar_prefetch=0,
                grid=(n_t,),
                in_specs=[
                    pl.BlockSpec((tm_sel, H), lambda i: (i, 0)),   # x tile
                    pl.BlockSpec((I, H), lambda i: (0, 0)),        # full W_up
                    pl.BlockSpec((I, H), lambda i: (0, 0)),        # full W_down^T
                ],
                out_specs=pl.BlockSpec((tm_sel, H), lambda i: (i, 0)),
            ),
            compiler_params=pltpu.CompilerParams(
                dimension_semantics=("parallel",),
                vmem_limit_bytes=vmem_limit,
            ),
            cost_estimate=pl.CostEstimate(
                flops=flops, transcendentals=0, bytes_accessed=bytes_accessed),
        )(xc, w_up_c, w_down_t)
    else:
        n_i = I // ti_sel
        stream_buf = _stream_buf(tm_sel, ti_sel)
        vmem_limit = int(max(min(stream_buf + (6 << 20), vmem_cap - (12 << 20)),
                             16 << 20))
        bytes_accessed = int(xc.size * bpe + weight_bytes * n_t
                             + T_pad * H * out_bpe)
        out = pl.pallas_call(
            _arcee_mlp_stream_kernel,
            out_shape=jax.ShapeDtypeStruct((T_pad, H), out_dtype),
            grid_spec=pltpu.PrefetchScalarGridSpec(
                num_scalar_prefetch=0,
                grid=(n_t, n_i),
                in_specs=[
                    pl.BlockSpec((tm_sel, H), lambda i, k: (i, 0)),   # x tile
                    pl.BlockSpec((ti_sel, H), lambda i, k: (k, 0)),   # W_up slab
                    pl.BlockSpec((ti_sel, H), lambda i, k: (k, 0)),   # W_down^T slab
                ],
                out_specs=pl.BlockSpec((tm_sel, H), lambda i, k: (i, 0)),
                scratch_shapes=[pltpu.VMEM((tm_sel, H), jnp.float32)],
            ),
            compiler_params=pltpu.CompilerParams(
                dimension_semantics=("parallel", "arbitrary"),
                vmem_limit_bytes=vmem_limit,
            ),
            cost_estimate=pl.CostEstimate(
                flops=flops, transcendentals=0, bytes_accessed=bytes_accessed),
        )(xc, w_up_c, w_down_t)

    return out[:T] if T_pad != T else out


# --------------------------------------------------------------------------- #
# Pure-JAX reference (takes raw PyTorch-layout weights)
# --------------------------------------------------------------------------- #
def arcee_mlp_ref(x, w_up, w_down, compute_dtype=jnp.float32):
    """Reference: relu(x @ W_up.T)**2 @ W_down.T, optional bf16 emulation."""
    xc = x.astype(compute_dtype)
    wu = w_up.astype(compute_dtype)
    wd = w_down.astype(compute_dtype)
    h = lax.dot_general(xc, wu, (((1,), (1,)), ((), ())),
                        preferred_element_type=jnp.float32)
    h = jnp.square(jnp.maximum(h, 0.0)).astype(compute_dtype)
    y = lax.dot_general(h, wd, (((1,), (1,)), ((), ())),
                        preferred_element_type=jnp.float32)
    return y.astype(x.dtype)


if __name__ == "__main__":
    # Small shapes consistent with the module: tokens=256, hidden=256, inter=512.
    T, H, I = 256, 256, 512
    key = jax.random.PRNGKey(0)
    kx, ku, kd = jax.random.split(key, 3)

    x = jax.random.normal(kx, (T, H), dtype=jnp.float32)
    # Deterministic parameter init (no checkpoint), PyTorch weight layouts.
    w_up = jax.random.normal(ku, (I, H), dtype=jnp.float32) * (1.0 / H ** 0.5)
    w_down = jax.random.normal(kd, (H, I), dtype=jnp.float32) * (1.0 / I ** 0.5)

    # One-time (load-time) weight preprocessing: bf16 cast + [I, H] re-layout.
    wu_c, wd_t = prepare_arcee_weights(w_up, w_down)

    # Fast path: weights resident in VMEM, grid = (token tiles,).
    out_fused = jax.block_until_ready(arcee_mlp(x, wu_c, wd_t, fuse_weights=True))
    # Streaming path: small tm/ti only to exercise the multi-step accumulator
    # path on tiny test shapes (production defaults keep ti >= 512).
    out_stream = jax.block_until_ready(
        arcee_mlp(x, wu_c, wd_t, fuse_weights=False, tm=128, ti=256))

    ref_bf16 = arcee_mlp_ref(x, w_up, w_down, compute_dtype=jnp.bfloat16)
    ref_f32 = arcee_mlp_ref(x, w_up, w_down, compute_dtype=jnp.float32)

    for name, out in (("fused", out_fused), ("stream", out_stream)):
        assert out.shape == (T, H), (name, out.shape)
        assert jnp.allclose(out, ref_bf16, atol=1e-2, rtol=1e-2), \
            f"{name}: mismatch vs bf16 reference"
        rel_err = jnp.linalg.norm(out - ref_f32) / jnp.linalg.norm(ref_f32)
        assert rel_err < 3e-2, f"{name}: relative error vs f32 reference {rel_err}"

    print("KERNEL_OK")
</pallas_src>

<mosaic_0001>
module attributes {stable_mosaic.version = 11 : i64} {
  func.func @_arcee_mlp_fused_kernel(%arg0: i32, %arg1: memref<256x256xbf16, #tpu.memory_space<vmem>>, %arg2: memref<512x256xbf16, #tpu.memory_space<vmem>>, %arg3: memref<512x256xbf16, #tpu.memory_space<vmem>>, %arg4: memref<256x256xf32, #tpu.memory_space<vmem>>) attributes {dimension_semantics = [#tpu.dimension_semantics<parallel>], iteration_bounds = array<i64: 1>, scalar_prefetch = 0 : i64, scratch_operands = 0 : i64, tpu.core_type = #tpu.core_type<tc>, window_params = [{transform_indices = @transform_0, window_bounds = array<i64: 256, 256>}, {pipeline_mode = #tpu.pipeline_mode<synchronous>, transform_indices = @transform_1, window_bounds = array<i64: 512, 256>}, {pipeline_mode = #tpu.pipeline_mode<synchronous>, transform_indices = @transform_2, window_bounds = array<i64: 512, 256>}, {transform_indices = @transform_3, window_bounds = array<i64: 256, 256>}]} {
    %c0 = arith.constant 0 : index
    %c0_0 = arith.constant 0 : index
    %0 = vector.load %arg1[%c0, %c0_0] : memref<256x256xbf16, #tpu.memory_space<vmem>>, vector<256x256xbf16>
    %c0_1 = arith.constant 0 : index
    %c0_2 = arith.constant 0 : index
    %1 = vector.load %arg2[%c0_1, %c0_2] : memref<512x256xbf16, #tpu.memory_space<vmem>>, vector<512x256xbf16>
    %cst = arith.constant dense<0.000000e+00> : vector<256x512xf32>
    %2 = tpu.matmul %0, %1, %cst {dimension_numbers = #tpu.dot_dimension_numbers<[1], [1], [0], [0], [0, 0, 1, 0], [], []>} : vector<256x256xbf16>, vector<512x256xbf16>, vector<256x512xf32> -> vector<256x512xf32>
    %cst_3 = arith.constant 0.000000e+00 : f32
    %3 = vector.broadcast %cst_3 : f32 to vector<256x512xf32>
    %4 = arith.maximumf %2, %3 : vector<256x512xf32>
    %5 = arith.mulf %4, %4 : vector<256x512xf32>
    %6 = arith.truncf %5 : vector<256x512xf32> to vector<256x512xbf16>
    %c0_4 = arith.constant 0 : index
    %c0_5 = arith.constant 0 : index
    %7 = vector.load %arg3[%c0_4, %c0_5] : memref<512x256xbf16, #tpu.memory_space<vmem>>, vector<512x256xbf16>
    %cst_6 = arith.constant dense<0.000000e+00> : vector<256x256xf32>
    %8 = tpu.matmul %6, %7, %cst_6 {dimension_numbers = #tpu.dot_dimension_numbers<[1], [0], [0], [1], [0, 0, 1, 1], [], []>} : vector<256x512xbf16>, vector<512x256xbf16>, vector<256x256xf32> -> vector<256x256xf32>
    %c0_7 = arith.constant 0 : index
    %c0_8 = arith.constant 0 : index
    %9 = vector.load %arg4[%c0_7, %c0_8] : memref<256x256xf32, #tpu.memory_space<vmem>>, vector<256x256xf32>
    tpu.vector_store %arg4[%c0_7, %c0_8], %8 {strides = array<i32>} : memref<256x256xf32, #tpu.memory_space<vmem>>, vector<256x256xf32>,
    return
  }
  func.func @transform_0(%arg0: i32) -> (i32, i32) {
    %c0_i32 = arith.constant 0 : i32
    %c0_i32_0 = arith.constant 0 : i32
    return %arg0, %c0_i32 : i32, i32
  }
  func.func @transform_1(%arg0: i32) -> (i32, i32) {
    %c0_i32 = arith.constant 0 : i32
    %c0_i32_0 = arith.constant 0 : i32
    %c0_i32_1 = arith.constant 0 : i32
    return %c0_i32, %c0_i32_0 : i32, i32
  }
  func.func @transform_2(%arg0: i32) -> (i32, i32) {
    %c0_i32 = arith.constant 0 : i32
    %c0_i32_0 = arith.constant 0 : i32
    %c0_i32_1 = arith.constant 0 : i32
    return %c0_i32, %c0_i32_0 : i32, i32
  }
  func.func @transform_3(%arg0: i32) -> (i32, i32) {
    %c0_i32 = arith.constant 0 : i32
    %c0_i32_0 = arith.constant 0 : i32
    return %arg0, %c0_i32 : i32, i32
  }
}

</mosaic_0001>

<llo_original>
// kernel: tpu_custom_call.1
$region0: #{tpu_custom_call.1}
  #allocation0 [shape = 'u32[]', space=smem, size = 0x4, offset = 0x4, fixed_abs, tag = 'smem constant byte address 0x4 - core index']
  #allocation1 [shape = 'u32[144,128]{1,0:T(1,128)}', space=vmem, size = 0x12000, scoped, tag = 'internal scratch']
  %s0 = inlined_call_operand.hbm [shape: bf16[256,256], index: 0, kind: input, shape index: {}]
  %s1 = inlined_call_operand.hbm [shape: bf16[512,256], index: 1, kind: input, shape index: {}]
  %s2 = inlined_call_operand.hbm [shape: bf16[512,256], index: 2, kind: input, shape index: {}]
  %s3 = inlined_call_operand.hbm [shape: f32[256,256], index: 3, kind: output, shape index: {}]
  %s4 = sld [smem:[#allocation0]]
  $region34: #{tpu_custom_call.1} parent=0
    _
  %s6 = ssub.s32 1, %s4
  %s7 = scalar_select 0, %s6, %s4
  $region1: #{tpu_custom_call.1} parent=0
    #allocation2 [shape = 'u8[131072]{0}', space=vmem, size = 0x20000, scoped, tag = 'input window, operand 0, single buffered']
    #allocation3 [shape = 's32[1]{0}', space=sflag, size = 0x4, scoped, tag = 'scoped memory for tpu_custom_call.1']
    #allocation4 [shape = 's32[1]{0}', space=sflag, size = 0x4, scoped, tag = 'scoped memory for tpu_custom_call.1']
    #allocation5 [shape = 'u8[262144]{0}', space=vmem, size = 0x40000, scoped, tag = 'input window, operand 1, single buffered']
    #allocation6 [shape = 's32[1]{0}', space=sflag, size = 0x4, scoped, tag = 'scoped memory for tpu_custom_call.1']
    #allocation7 [shape = 'u8[262144]{0}', space=vmem, size = 0x40000, scoped, tag = 'input window, operand 2, single buffered']
    #allocation8 [shape = 'u8[262144]{0}', space=vmem, size = 0x40000, scoped, tag = 'output window, operand 0, single buffered']
    %8 = vsyncpa [#allocation3], 0
    %9 = vsyncpa [#allocation6], 0
    %10 = vsyncpa [#allocation4], 0
    // Predicated region
    $region2: #{tpu_custom_call.1} parent=1 // pred_check
      _
    $region3: #{tpu_custom_call.1} parent=1 // pred_check_branch
      %12 = sbr.rel (0) target = $region5
    $region4: #{tpu_custom_call.1} parent=1 // pred_region
      %s14 = ssub.s32 4096, 4096
      %15 = vsyncadd [#allocation3], %s14
      %s16 = sshll.u32 [#allocation2], 4
      %s17 = int_to_ptr.vmem [resolvable:$true] %s16
      %22 = dma.hbm_to_vmem [thread:$0]  %s0, 4096, %s17, [#allocation3], 128, 128, 8
    $region5: #{tpu_custom_call.1} parent=1 // pred_fallthru
      _
    // Predicated region
    $region6: #{tpu_custom_call.1} parent=1 // pred_check
      _
    $region7: #{tpu_custom_call.1} parent=1 // pred_check_branch
      %24 = sbr.rel (0) target = $region9
    $region8: #{tpu_custom_call.1} parent=1 // pred_region
      %s26 = ssub.s32 8192, 8192
      %27 = vsyncadd [#allocation6], %s26
      %s28 = sshll.u32 [#allocation5], 4
      %s29 = int_to_ptr.vmem [resolvable:$true] %s28
      %34 = dma.hbm_to_vmem [thread:$0]  %s1, 8192, %s29, [#allocation6], 128, 128, 8
    $region9: #{tpu_custom_call.1} parent=1 // pred_fallthru
      _
    // Predicated region
    $region10: #{tpu_custom_call.1} parent=1 // pred_check
      _
    $region11: #{tpu_custom_call.1} parent=1 // pred_check_branch
      %36 = sbr.rel (0) target = $region13
    $region12: #{tpu_custom_call.1} parent=1 // pred_region
      %s38 = ssub.s32 8192, 8192
      %39 = vsyncadd [#allocation6], %s38
      %s40 = sshll.u32 [#allocation7], 4
      %s41 = int_to_ptr.vmem [resolvable:$true] %s40
      %46 = dma.hbm_to_vmem [thread:$0]  %s2, 8192, %s41, [#allocation6], 128, 128, 8
    $region13: #{tpu_custom_call.1} parent=1 // pred_fallthru
      _
    // Predicated region
    $region14: #{tpu_custom_call.1} parent=1 // pred_check
      _
    $region15: #{tpu_custom_call.1} parent=1 // pred_check_branch
      %48 = sbr.rel (0) target = $region17
    $region16: #{tpu_custom_call.1} parent=1 // pred_region
      %49 = dma.done [#allocation3], 4096
    $region17: #{tpu_custom_call.1} parent=1 // pred_fallthru
      _
    // Predicated region
    $region18: #{tpu_custom_call.1} parent=1 // pred_check
      _
    $region19: #{tpu_custom_call.1} parent=1 // pred_check_branch
      %51 = sbr.rel (0) target = $region21
    $region20: #{tpu_custom_call.1} parent=1 // pred_region
      %52 = dma.done [#allocation6], 8192
    $region21: #{tpu_custom_call.1} parent=1 // pred_fallthru
      _
    // Predicated region
    $region22: #{tpu_custom_call.1} parent=1 // pred_check
      _
    $region23: #{tpu_custom_call.1} parent=1 // pred_check_branch
      %54 = sbr.rel (0) target = $region25
    $region24: #{tpu_custom_call.1} parent=1 // pred_region
      %55 = dma.done [#allocation6], 8192
    $region25: #{tpu_custom_call.1} parent=1 // pred_fallthru
      _
    %v56 = vld [vmem:[#allocation2] sm:$0xff]
    %v57 = vld [vmem:[#allocation2 + $0x8] sm:$0xff]
    %v58 = vld [vmem:[#allocation2 + $0x10] sm:$0xff]
    %v59 = vld [vmem:[#allocation2 + $0x18] sm:$0xff]
    %v60 = vld [vmem:[#allocation2 + $0x20] sm:$0xff]
    %v61 = vld [vmem:[#allocation2 + $0x28] sm:$0xff]
    %v62 = vld [vmem:[#allocation2 + $0x30] sm:$0xff]
    %v63 = vld [vmem:[#allocation2 + $0x38] sm:$0xff]
    %v64 = vld [vmem:[#allocation2 + $0x40] sm:$0xff]
    %v65 = vld [vmem:[#allocation2 + $0x48] sm:$0xff]
    %v66 = vld [vmem:[#allocation2 + $0x50] sm:$0xff]
    %v67 = vld [vmem:[#allocation2 + $0x58] sm:$0xff]
    %v68 = vld [vmem:[#allocation2 + $0x60] sm:$0xff]
    %v69 = vld [vmem:[#allocation2 + $0x68] sm:$0xff]
    %v70 = vld [vmem:[#allocation2 + $0x70] sm:$0xff]
    %v71 = vld [vmem:[#allocation2 + $0x78] sm:$0xff]
    %v72 = vld [vmem:[#allocation2 + $0x80] sm:$0xff]
    %v73 = vld [vmem:[#allocation2 + $0x88] sm:$0xff]
    %v74 = vld [vmem:[#allocation2 + $0x90] sm:$0xff]
    %v75 = vld [vmem:[#allocation2 + $0x98] sm:$0xff]
    %v76 = vld [vmem:[#allocation2 + $0xa0] sm:$0xff]
    %v77 = vld [vmem:[#allocation2 + $0xa8] sm:$0xff]
    %v78 = vld [vmem:[#allocation2 + $0xb0] sm:$0xff]
    %v79 = vld [vmem:[#allocation2 + $0xb8] sm:$0xff]
    %v80 = vld [vmem:[#allocation2 + $0xc0] sm:$0xff]
    %v81 = vld [vmem:[#allocation2 + $0xc8] sm:$0xff]
    %v82 = vld [vmem:[#allocation2 + $0xd0] sm:$0xff]
    %v83 = vld [vmem:[#allocation2 + $0xd8] sm:$0xff]
    %v84 = vld [vmem:[#allocation2 + $0xe0] sm:$0xff]
    %v85 = vld [vmem:[#allocation2 + $0xe8] sm:$0xff]
    %v86 = vld [vmem:[#allocation2 + $0xf0] sm:$0xff]
    %v87 = vld [vmem:[#allocation2 + $0xf8] sm:$0xff]
    %v88 = vld [vmem:[#allocation5] sm:$0xff]
    %v89 = vld [vmem:[#allocation5 + $0x8] sm:$0xff]
    %v90 = vld [vmem:[#allocation5 + $0x10] sm:$0xff]
    %v91 = vld [vmem:[#allocation5 + $0x18] sm:$0xff]
    %v92 = vld [vmem:[#allocation5 + $0x20] sm:$0xff]
    %v93 = vld [vmem:[#allocation5 + $0x28] sm:$0xff]
    %v94 = vld [vmem:[#allocation5 + $0x30] sm:$0xff]
    %v95 = vld [vmem:[#allocation5 + $0x38] sm:$0xff]
    %v96 = vld [vmem:[#allocation5 + $0x40] sm:$0xff]
    %v97 = vld [vmem:[#allocation5 + $0x48] sm:$0xff]
    %v98 = vld [vmem:[#allocation5 + $0x50] sm:$0xff]
    %v99 = vld [vmem:[#allocation5 + $0x58] sm:$0xff]
    %v100 = vld [vmem:[#allocation5 + $0x60] sm:$0xff]
    %v101 = vld [vmem:[#allocation5 + $0x68] sm:$0xff]
    %v102 = vld [vmem:[#allocation5 + $0x70] sm:$0xff]
    %v103 = vld [vmem:[#allocation5 + $0x78] sm:$0xff]
    %v104 = vld [vmem:[#allocation5 + $0x80] sm:$0xff]
    %v105 = vld [vmem:[#allocation5 + $0x88] sm:$0xff]
    %v106 = vld [vmem:[#allocation5 + $0x90] sm:$0xff]
    %v107 = vld [vmem:[#allocation5 + $0x98] sm:$0xff]
    %v108 = vld [vmem:[#allocation5 + $0xa0] sm:$0xff]
    %v109 = vld [vmem:[#allocation5 + $0xa8] sm:$0xff]
    %v110 = vld [vmem:[#allocation5 + $0xb0] sm:$0xff]
    %v111 = vld [vmem:[#allocation5 + $0xb8] sm:$0xff]
    %v112 = vld [vmem:[#allocation5 + $0xc0] sm:$0xff]
    %v113 = vld [vmem:[#allocation5 + $0xc8] sm:$0xff]
    %v114 = vld [vmem:[#allocation5 + $0xd0] sm:$0xff]
    %v115 = vld [vmem:[#allocation5 + $0xd8] sm:$0xff]
    %v116 = vld [vmem:[#allocation5 + $0xe0] sm:$0xff]
    %v117 = vld [vmem:[#allocation5 + $0xe8] sm:$0xff]
    %v118 = vld [vmem:[#allocation5 + $0xf0] sm:$0xff]
    %v119 = vld [vmem:[#allocation5 + $0xf8] sm:$0xff]
    %v120 = vld [vmem:[#allocation5 + $0x100] sm:$0xff]
    %v121 = vld [vmem:[#allocation5 + $0x108] sm:$0xff]
    %v122 = vld [vmem:[#allocation5 + $0x110] sm:$0xff]
    %v123 = vld [vmem:[#allocation5 + $0x118] sm:$0xff]
    %v124 = vld [vmem:[#allocation5 + $0x120] sm:$0xff]
    %v125 = vld [vmem:[#allocation5 + $0x128] sm:$0xff]
    %v126 = vld [vmem:[#allocation5 + $0x130] sm:$0xff]
    %v127 = vld [vmem:[#allocation5 + $0x138] sm:$0xff]
    %v128 = vld [vmem:[#allocation5 + $0x140] sm:$0xff]
    %v129 = vld [vmem:[#allocation5 + $0x148] sm:$0xff]
    %v130 = vld [vmem:[#allocation5 + $0x150] sm:$0xff]
    %v131 = vld [vmem:[#allocation5 + $0x158] sm:$0xff]
    %v132 = vld [vmem:[#allocation5 + $0x160] sm:$0xff]
    %v133 = vld [vmem:[#allocation5 + $0x168] sm:$0xff]
    %v134 = vld [vmem:[#allocation5 + $0x170] sm:$0xff]
    %v135 = vld [vmem:[#allocation5 + $0x178] sm:$0xff]
    %v136 = vld [vmem:[#allocation5 + $0x180] sm:$0xff]
    %v137 = vld [vmem:[#allocation5 + $0x188] sm:$0xff]
    %v138 = vld [vmem:[#allocation5 + $0x190] sm:$0xff]
    %v139 = vld [vmem:[#allocation5 + $0x198] sm:$0xff]
    %v140 = vld [vmem:[#allocation5 + $0x1a0] sm:$0xff]
    %v141 = vld [vmem:[#allocation5 + $0x1a8] sm:$0xff]
    %v142 = vld [vmem:[#allocation5 + $0x1b0] sm:$0xff]
    %v143 = vld [vmem:[#allocation5 + $0x1b8] sm:$0xff]
    %v144 = vld [vmem:[#allocation5 + $0x1c0] sm:$0xff]
    %v145 = vld [vmem:[#allocation5 + $0x1c8] sm:$0xff]
    %v146 = vld [vmem:[#allocation5 + $0x1d0] sm:$0xff]
    %v147 = vld [vmem:[#allocation5 + $0x1d8] sm:$0xff]
    %v148 = vld [vmem:[#allocation5 + $0x1e0] sm:$0xff]
    %v149 = vld [vmem:[#allocation5 + $0x1e8] sm:$0xff]
    %v150 = vld [vmem:[#allocation5 + $0x1f0] sm:$0xff]
    %v151 = vld [vmem:[#allocation5 + $0x1f8] sm:$0xff]
    %v184 = vunpack.c.l.b16 %v56
    %v185 = vunpack.c.h.b16 %v56
    %v186 = vunpack.c.l.b16 %v57
    %v187 = vunpack.c.h.b16 %v57
    %v188 = vunpack.c.l.b16 %v58
    %v189 = vunpack.c.h.b16 %v58
    %v190 = vunpack.c.l.b16 %v59
    %v191 = vunpack.c.h.b16 %v59
    %v192 = vunpack.c.l.b16 %v60
    %v193 = vunpack.c.h.b16 %v60
    %v194 = vunpack.c.l.b16 %v61
    %v195 = vunpack.c.h.b16 %v61
    %v196 = vunpack.c.l.b16 %v62
    %v197 = vunpack.c.h.b16 %v62
    %v198 = vunpack.c.l.b16 %v63
    %v199 = vunpack.c.h.b16 %v63
    %v200 = vunpack.c.l.b16 %v64
    %v201 = vunpack.c.h.b16 %v64
    %v202 = vunpack.c.l.b16 %v65
    %v203 = vunpack.c.h.b16 %v65
    %v204 = vunpack.c.l.b16 %v66
    %v205 = vunpack.c.h.b16 %v66
    %v206 = vunpack.c.l.b16 %v67
    %v207 = vunpack.c.h.b16 %v67
    %v208 = vunpack.c.l.b16 %v68
    %v209 = vunpack.c.h.b16 %v68
    %v210 = vunpack.c.l.b16 %v69
    %v211 = vunpack.c.h.b16 %v69
    %v212 = vunpack.c.l.b16 %v70
    %v213 = vunpack.c.h.b16 %v70
    %v214 = vunpack.c.l.b16 %v71
    %v215 = vunpack.c.h.b16 %v71
    %v216 = vunpack.c.l.b16 %v72
    %v217 = vunpack.c.h.b16 %v72
    %v218 = vunpack.c.l.b16 %v73
    %v219 = vunpack.c.h.b16 %v73
    %v220 = vunpack.c.l.b16 %v74
    %v221 = vunpack.c.h.b16 %v74
    %v222 = vunpack.c.l.b16 %v75
    %v223 = vunpack.c.h.b16 %v75
    %v224 = vunpack.c.l.b16 %v76
    %v225 = vunpack.c.h.b16 %v76
    %v226 = vunpack.c.l.b16 %v77
    %v227 = vunpack.c.h.b16 %v77
    %v228 = vunpack.c.l.b16 %v78
    %v229 = vunpack.c.h.b16 %v78
    %v230 = vunpack.c.l.b16 %v79
    %v231 = vunpack.c.h.b16 %v79
    %v232 = vunpack.c.l.b16 %v80
    %v233 = vunpack.c.h.b16 %v80
    %v234 = vunpack.c.l.b16 %v81
    %v235 = vunpack.c.h.b16 %v81
    %v236 = vunpack.c.l.b16 %v82
    %v237 = vunpack.c.h.b16 %v82
    %v238 = vunpack.c.l.b16 %v83
    %v239 = vunpack.c.h.b16 %v83
    %v240 = vunpack.c.l.b16 %v84
    %v241 = vunpack.c.h.b16 %v84
    %v242 = vunpack.c.l.b16 %v85
    %v243 = vunpack.c.h.b16 %v85
    %v244 = vunpack.c.l.b16 %v86
    %v245 = vunpack.c.h.b16 %v86
    %v246 = vunpack.c.l.b16 %v87
    %v247 = vunpack.c.h.b16 %v87
    %v248 = vpack.c.b16 %v186, %v184
    %v249 = vpack.c.b16 %v187, %v185
    %v250 = vpack.c.b16 %v190, %v188
    %v251 = vpack.c.b16 %v191, %v189
    %v252 = vpack.c.b16 %v194, %v192
    %v253 = vpack.c.b16 %v195, %v193
    %v254 = vpack.c.b16 %v198, %v196
    %v255 = vpack.c.b16 %v199, %v197
    %v256 = vpack.c.b16 %v202, %v200
    %v257 = vpack.c.b16 %v203, %v201
    %v258 = vpack.c.b16 %v206, %v204
    %v259 = vpack.c.b16 %v207, %v205
    %v260 = vpack.c.b16 %v210, %v208
    %v261 = vpack.c.b16 %v211, %v209
    %v262 = vpack.c.b16 %v214, %v212
    %v263 = vpack.c.b16 %v215, %v213
    %v264 = vpack.c.b16 %v218, %v216
    %v265 = vpack.c.b16 %v219, %v217
    %v266 = vpack.c.b16 %v222, %v220
    %v267 = vpack.c.b16 %v223, %v221
    %v268 = vpack.c.b16 %v226, %v224
    %v269 = vpack.c.b16 %v227, %v225
    %v270 = vpack.c.b16 %v230, %v228
    %v271 = vpack.c.b16 %v231, %v229
    %v272 = vpack.c.b16 %v234, %v232
    %v273 = vpack.c.b16 %v235, %v233
    %v274 = vpack.c.b16 %v238, %v236
    %v275 = vpack.c.b16 %v239, %v237
    %v276 = vpack.c.b16 %v242, %v240
    %v277 = vpack.c.b16 %v243, %v241
    %v278 = vpack.c.b16 %v246, %v244
    %v279 = vpack.c.b16 %v247, %v245
    %v376 = vunpack.c.l.b16 %v88
    %v377 = vunpack.c.h.b16 %v88
    %v378 = vunpack.c.l.b16 %v89
    %v379 = vunpack.c.h.b16 %v89
    %v380 = vunpack.c.l.b16 %v90
    %v381 = vunpack.c.h.b16 %v90
    %v382 = vunpack.c.l.b16 %v91
    %v383 = vunpack.c.h.b16 %v91
    %v384 = vunpack.c.l.b16 %v92
    %v385 = vunpack.c.h.b16 %v92
    %v386 = vunpack.c.l.b16 %v93
    %v387 = vunpack.c.h.b16 %v93
    %v388 = vunpack.c.l.b16 %v94
    %v389 = vunpack.c.h.b16 %v94
    %v390 = vunpack.c.l.b16 %v95
    %v391 = vunpack.c.h.b16 %v95
    %v392 = vunpack.c.l.b16 %v96
    %v393 = vunpack.c.h.b16 %v96
    %v394 = vunpack.c.l.b16 %v97
    %v395 = vunpack.c.h.b16 %v97
    %v396 = vunpack.c.l.b16 %v98
    %v397 = vunpack.c.h.b16 %v98
    %v398 = vunpack.c.l.b16 %v99
    %v399 = vunpack.c.h.b16 %v99
    %v400 = vunpack.c.l.b16 %v100
    %v401 = vunpack.c.h.b16 %v100
    %v402 = vunpack.c.l.b16 %v101
    %v403 = vunpack.c.h.b16 %v101
    %v404 = vunpack.c.l.b16 %v102
    %v405 = vunpack.c.h.b16 %v102
    %v406 = vunpack.c.l.b16 %v103
    %v407 = vunpack.c.h.b16 %v103
    %v408 = vunpack.c.l.b16 %v104
    %v409 = vunpack.c.h.b16 %v104
    %v410 = vunpack.c.l.b16 %v105
    %v411 = vunpack.c.h.b16 %v105
    %v412 = vunpack.c.l.b16 %v106
    %v413 = vunpack.c.h.b16 %v106
    %v414 = vunpack.c.l.b16 %v107
    %v415 = vunpack.c.h.b16 %v107
    %v416 = vunpack.c.l.b16 %v108
    %v417 = vunpack.c.h.b16 %v108
    %v418 = vunpack.c.l.b16 %v109
    %v419 = vunpack.c.h.b16 %v109
    %v420 = vunpack.c.l.b16 %v110
    %v421 = vunpack.c.h.b16 %v110
    %v422 = vunpack.c.l.b16 %v111
    %v423 = vunpack.c.h.b16 %v111
    %v424 = vunpack.c.l.b16 %v112
    %v425 = vunpack.c.h.b16 %v112
    %v426 = vunpack.c.l.b16 %v113
    %v427 = vunpack.c.h.b16 %v113
    %v428 = vunpack.c.l.b16 %v114
    %v429 = vunpack.c.h.b16 %v114
    %v430 = vunpack.c.l.b16 %v115
    %v431 = vunpack.c.h.b16 %v115
    %v432 = vunpack.c.l.b16 %v116
    %v433 = vunpack.c.h.b16 %v116
    %v434 = vunpack.c.l.b16 %v117
    %v435 = vunpack.c.h.b16 %v117
    %v436 = vunpack.c.l.b16 %v118
    %v437 = vunpack.c.h.b16 %v118
    %v438 = vunpack.c.l.b16 %v119
    %v439 = vunpack.c.h.b16 %v119
    %v440 = vunpack.c.l.b16 %v120
    %v441 = vunpack.c.h.b16 %v120
    %v442 = vunpack.c.l.b16 %v121
    %v443 = vunpack.c.h.b16 %v121
    %v444 = vunpack.c.l.b16 %v122
    %v445 = vunpack.c.h.b16 %v122
    %v446 = vunpack.c.l.b16 %v123
    %v447 = vunpack.c.h.b16 %v123
    %v448 = vunpack.c.l.b16 %v124
    %v449 = vunpack.c.h.b16 %v124
    %v450 = vunpack.c.l.b16 %v125
    %v451 = vunpack.c.h.b16 %v125
    %v452 = vunpack.c.l.b16 %v126
    %v453 = vunpack.c.h.b16 %v126
    %v454 = vunpack.c.l.b16 %v127
    %v455 = vunpack.c.h.b16 %v127
    %v456 = vunpack.c.l.b16 %v128
    %v457 = vunpack.c.h.b16 %v128
    %v458 = vunpack.c.l.b16 %v129
    %v459 = vunpack.c.h.b16 %v129
    %v460 = vunpack.c.l.b16 %v130
    %v461 = vunpack.c.h.b16 %v130
    %v462 = vunpack.c.l.b16 %v131
    %v463 = vunpack.c.h.b16 %v131
    %v464 = vunpack.c.l.b16 %v132
    %v465 = vunpack.c.h.b16 %v132
    %v466 = vunpack.c.l.b16 %v133
    %v467 = vunpack.c.h.b16 %v133
    %v468 = vunpack.c.l.b16 %v134
    %v469 = vunpack.c.h.b16 %v134
    %v470 = vunpack.c.l.b16 %v135
    %v471 = vunpack.c.h.b16 %v135
    %v472 = vunpack.c.l.b16 %v136
    %v473 = vunpack.c.h.b16 %v136
    %v474 = vunpack.c.l.b16 %v137
    %v475 = vunpack.c.h.b16 %v137
    %v476 = vunpack.c.l.b16 %v138
    %v477 = vunpack.c.h.b16 %v138
    %v478 = vunpack.c.l.b16 %v139
    %v479 = vunpack.c.h.b16 %v139
    %v480 = vunpack.c.l.b16 %v140
    %v481 = vunpack.c.h.b16 %v140
    %v482 = vunpack.c.l.b16 %v141
    %v483 = vunpack.c.h.b16 %v141
    %v484 = vunpack.c.l.b16 %v142
    %v485 = vunpack.c.h.b16 %v142
    %v486 = vunpack.c.l.b16 %v143
    %v487 = vunpack.c.h.b16 %v143
    %v488 = vunpack.c.l.b16 %v144
    %v489 = vunpack.c.h.b16 %v144
    %v490 = vunpack.c.l.b16 %v145
    %v491 = vunpack.c.h.b16 %v145
    %v492 = vunpack.c.l.b16 %v146
    %v493 = vunpack.c.h.b16 %v146
    %v494 = vunpack.c.l.b16 %v147
    %v495 = vunpack.c.h.b16 %v147
    %v496 = vunpack.c.l.b16 %v148
    %v497 = vunpack.c.h.b16 %v148
    %v498 = vunpack.c.l.b16 %v149
    %v499 = vunpack.c.h.b16 %v149
    %v500 = vunpack.c.l.b16 %v150
    %v501 = vunpack.c.h.b16 %v150
    %v502 = vunpack.c.l.b16 %v151
    %v503 = vunpack.c.h.b16 %v151
    %v504 = vpack.c.b16 %v378, %v376
    %v505 = vpack.c.b16 %v379, %v377
    %v506 = vpack.c.b16 %v382, %v380
    %v507 = vpack.c.b16 %v383, %v381
    %v508 = vpack.c.b16 %v386, %v384
    %v509 = vpack.c.b16 %v387, %v385
    %v510 = vpack.c.b16 %v390, %v388
    %v511 = vpack.c.b16 %v391, %v389
    %v512 = vpack.c.b16 %v394, %v392
    %v513 = vpack.c.b16 %v395, %v393
    %v514 = vpack.c.b16 %v398, %v396
    %v515 = vpack.c.b16 %v399, %v397
    %v516 = vpack.c.b16 %v402, %v400
    %v517 = vpack.c.b16 %v403, %v401
    %v518 = vpack.c.b16 %v406, %v404
    %v519 = vpack.c.b16 %v407, %v405
    %v520 = vpack.c.b16 %v410, %v408
    %v521 = vpack.c.b16 %v411, %v409
    %v522 = vpack.c.b16 %v414, %v412
    %v523 = vpack.c.b16 %v415, %v413
    %v524 = vpack.c.b16 %v418, %v416
    %v525 = vpack.c.b16 %v419, %v417
    %v526 = vpack.c.b16 %v422, %v420
    %v527 = vpack.c.b16 %v423, %v421
    %v528 = vpack.c.b16 %v426, %v424
    %v529 = vpack.c.b16 %v427, %v425
    %v530 = vpack.c.b16 %v430, %v428
    %v531 = vpack.c.b16 %v431, %v429
    %v532 = vpack.c.b16 %v434, %v432
    %v533 = vpack.c.b16 %v435, %v433
    %v534 = vpack.c.b16 %v438, %v436
    %v535 = vpack.c.b16 %v439, %v437
    %v536 = vpack.c.b16 %v442, %v440
    %v537 = vpack.c.b16 %v443, %v441
    %v538 = vpack.c.b16 %v446, %v444
    %v539 = vpack.c.b16 %v447, %v445
    %v540 = vpack.c.b16 %v450, %v448
    %v541 = vpack.c.b16 %v451, %v449
    %v542 = vpack.c.b16 %v454, %v452
    %v543 = vpack.c.b16 %v455, %v453
    %v544 = vpack.c.b16 %v458, %v456
    %v545 = vpack.c.b16 %v459, %v457
    %v546 = vpack.c.b16 %v462, %v460
    %v547 = vpack.c.b16 %v463, %v461
    %v548 = vpack.c.b16 %v466, %v464
    %v549 = vpack.c.b16 %v467, %v465
    %v550 = vpack.c.b16 %v470, %v468
    %v551 = vpack.c.b16 %v471, %v469
    %v552 = vpack.c.b16 %v474, %v472
    %v553 = vpack.c.b16 %v475, %v473
    %v554 = vpack.c.b16 %v478, %v476
    %v555 = vpack.c.b16 %v479, %v477
    %v556 = vpack.c.b16 %v482, %v480
    %v557 = vpack.c.b16 %v483, %v481
    %v558 = vpack.c.b16 %v486, %v484
    %v559 = vpack.c.b16 %v487, %v485
    %v560 = vpack.c.b16 %v490, %v488
    %v561 = vpack.c.b16 %v491, %v489
    %v562 = vpack.c.b16 %v494, %v492
    %v563 = vpack.c.b16 %v495, %v493
    %v564 = vpack.c.b16 %v498, %v496
    %v565 = vpack.c.b16 %v499, %v497
    %v566 = vpack.c.b16 %v502, %v500
    %v567 = vpack.c.b16 %v503, %v501
    %632 = vmatprep.subr.bf16.mxu0 %v505
    %633 = vmatpush1.bf16.xpose.msra.mxu0 %v504
    %634 = vmatprep.subr.bf16.mxu0 %v507
    %635 = vmatpush1.bf16.xpose.msra.mxu0 %v506
    %636 = vmatprep.subr.bf16.mxu0 %v509
    %637 = vmatpush1.bf16.xpose.msra.mxu0 %v508
    %638 = vmatprep.subr.bf16.mxu0 %v511
    %639 = vmatpush1.bf16.xpose.msra.mxu0 %v510
    %640 = vmatprep.subr.bf16.mxu0 %v513
    %641 = vmatpush1.bf16.xpose.msra.mxu0 %v512
    %642 = vmatprep.subr.bf16.mxu0 %v515
    %643 = vmatpush1.bf16.xpose.msra.mxu0 %v514
    %644 = vmatprep.subr.bf16.mxu0 %v517
    %645 = vmatpush1.bf16.xpose.msra.mxu0 %v516
    %646 = vmatprep.subr.bf16.mxu0 %v519
    %647 = vmatpush1.bf16.xpose.msra.mxu0 %v518
    %648 = vmatprep.subr.bf16.mxu0 %v521
    %649 = vmatpush1.bf16.xpose.msra.mxu0 %v520
    %650 = vmatprep.subr.bf16.mxu0 %v523
    %651 = vmatpush1.bf16.xpose.msra.mxu0 %v522
    %652 = vmatprep.subr.bf16.mxu0 %v525
    %653 = vmatpush1.bf16.xpose.msra.mxu0 %v524
    %654 = vmatprep.subr.bf16.mxu0 %v527
    %655 = vmatpush1.bf16.xpose.msra.mxu0 %v526
    %656 = vmatprep.subr.bf16.mxu0 %v529
    %657 = vmatpush1.bf16.xpose.msra.mxu0 %v528
    %658 = vmatprep.subr.bf16.mxu0 %v531
    %659 = vmatpush1.bf16.xpose.msra.mxu0 %v530
    %660 = vmatprep.subr.bf16.mxu0 %v533
    %661 = vmatpush1.bf16.xpose.msra.mxu0 %v532
    %662 = vmatprep.subr.bf16.mxu0 %v535
    %663 = vmatpush1.bf16.xpose.msra.mxu0 %v534
    %664 = vmatprep.mubr.bf16.mxu0 %v249
    %665 = vmatmul.mubr.bf16.gmra.mrb[0].mxu0 %v248
    %v666 = vpop.f32.mrb[0].mxu0
    %v667 = vadd.f32 0.0, %v666
    %v668 = vpop.f32.mrb[0].mxu0
    %v669 = vadd.f32 0.0, %v668
    %v670 = vpop.f32.mrb[0].mxu0
    %v671 = vadd.f32 0.0, %v670
    %v672 = vpop.f32.mrb[0].mxu0
    %v673 = vadd.f32 0.0, %v672
    %674 = vmatprep.mubr.bf16.mxu0 %v251
    %675 = vmatmul.mubr.bf16.gmra.mrb[0].mxu0 %v250
    %v676 = vpop.f32.mrb[0].mxu0
    %v677 = vadd.f32 0.0, %v676
    %v678 = vpop.f32.mrb[0].mxu0
    %v679 = vadd.f32 0.0, %v678
    %v680 = vpop.f32.mrb[0].mxu0
    %v681 = vadd.f32 0.0, %v680
    %v682 = vpop.f32.mrb[0].mxu0
    %v683 = vadd.f32 0.0, %v682
    %684 = vmatprep.mubr.bf16.mxu0 %v253
    %685 = vmatmul.mubr.bf16.gmra.mrb[0].mxu0 %v252
    %v686 = vpop.f32.mrb[0].mxu0
    %v687 = vadd.f32 0.0, %v686
    %v688 = vpop.f32.mrb[0].mxu0
    %v689 = vadd.f32 0.0, %v688
    %v690 = vpop.f32.mrb[0].mxu0
    %v691 = vadd.f32 0.0, %v690
    %v692 = vpop.f32.mrb[0].mxu0
    %v693 = vadd.f32 0.0, %v692
    %694 = vmatprep.mubr.bf16.mxu0 %v255
    %695 = vmatmul.mubr.bf16.gmra.mrb[0].mxu0 %v254
    %v696 = vpop.f32.mrb[0].mxu0
    %v697 = vadd.f32 0.0, %v696
    %v698 = vpop.f32.mrb[0].mxu0
    %v699 = vadd.f32 0.0, %v698
    %v700 = vpop.f32.mrb[0].mxu0
    %v701 = vadd.f32 0.0, %v700
    %v702 = vpop.f32.mrb[0].mxu0
    %v703 = vadd.f32 0.0, %v702
    %704 = vmatprep.mubr.bf16.mxu0 %v257
    %705 = vmatmul.mubr.bf16.gmra.mrb[0].mxu0 %v256
    %v706 = vpop.f32.mrb[0].mxu0
    %v707 = vadd.f32 0.0, %v706
    %v708 = vpop.f32.mrb[0].mxu0
    %v709 = vadd.f32 0.0, %v708
    %v710 = vpop.f32.mrb[0].mxu0
    %v711 = vadd.f32 0.0, %v710
    %v712 = vpop.f32.mrb[0].mxu0
    %v713 = vadd.f32 0.0, %v712
    %714 = vmatprep.mubr.bf16.mxu0 %v259
    %715 = vmatmul.mubr.bf16.gmra.mrb[0].mxu0 %v258
    %v716 = vpop.f32.mrb[0].mxu0
    %v717 = vadd.f32 0.0, %v716
    %v718 = vpop.f32.mrb[0].mxu0
    %v719 = vadd.f32 0.0, %v718
    %v720 = vpop.f32.mrb[0].mxu0
    %v721 = vadd.f32 0.0, %v720
    %v722 = vpop.f32.mrb[0].mxu0
    %v723 = vadd.f32 0.0, %v722
    %724 = vmatprep.mubr.bf16.mxu0 %v261
    %725 = vmatmul.mubr.bf16.gmra.mrb[0].mxu0 %v260
    %v726 = vpop.f32.mrb[0].mxu0
    %v727 = vadd.f32 0.0, %v726
    %v728 = vpop.f32.mrb[0].mxu0
    %v729 = vadd.f32 0.0, %v728
    %v730 = vpop.f32.mrb[0].mxu0
    %v731 = vadd.f32 0.0, %v730
    %v732 = vpop.f32.mrb[0].mxu0
    %v733 = vadd.f32 0.0, %v732
    %734 = vmatprep.mubr.bf16.mxu0 %v263
    %735 = vmatmul.mubr.bf16.gmra.mrb[0].mxu0 %v262
    %v736 = vpop.f32.mrb[0].mxu0
    %v737 = vadd.f32 0.0, %v736
    %v738 = vpop.f32.mrb[0].mxu0
    %v739 = vadd.f32 0.0, %v738
    %v740 = vpop.f32.mrb[0].mxu0
    %v741 = vadd.f32 0.0, %v740
    %v742 = vpop.f32.mrb[0].mxu0
    %v743 = vadd.f32 0.0, %v742
    %744 = vmatprep.mubr.bf16.mxu0 %v265
    %745 = vmatmul.mubr.bf16.gmra.mrb[0].mxu0 %v264
    %v746 = vpop.f32.mrb[0].mxu0
    %v747 = vadd.f32 0.0, %v746
    %v748 = vpop.f32.mrb[0].mxu0
    %v749 = vadd.f32 0.0, %v748
    %v750 = vpop.f32.mrb[0].mxu0
    %v751 = vadd.f32 0.0, %v750
    %v752 = vpop.f32.mrb[0].mxu0
    %v753 = vadd.f32 0.0, %v752
    %754 = vmatprep.mubr.bf16.mxu0 %v267
    %755 = vmatmul.mubr.bf16.gmra.mrb[0].mxu0 %v266
    %v756 = vpop.f32.mrb[0].mxu0
    %v757 = vadd.f32 0.0, %v756
    %v758 = vpop.f32.mrb[0].mxu0
    %v759 = vadd.f32 0.0, %v758
    %v760 = vpop.f32.mrb[0].mxu0
    %v761 = vadd.f32 0.0, %v760
    %v762 = vpop.f32.mrb[0].mxu0
    %v763 = vadd.f32 0.0, %v762
    %764 = vmatprep.mubr.bf16.mxu0 %v269
    %765 = vmatmul.mubr.bf16.gmra.mrb[0].mxu0 %v268
    %v766 = vpop.f32.mrb[0].mxu0
    %v767 = vadd.f32 0.0, %v766
    %v768 = vpop.f32.mrb[0].mxu0
    %v769 = vadd.f32 0.0, %v768
    %v770 = vpop.f32.mrb[0].mxu0
    %v771 = vadd.f32 0.0, %v770
    %v772 = vpop.f32.mrb[0].mxu0
    %v773 = vadd.f32 0.0, %v772
    %774 = vmatprep.mubr.bf16.mxu0 %v271
    %775 = vmatmul.mubr.bf16.gmra.mrb[0].mxu0 %v270
    %v776 = vpop.f32.mrb[0].mxu0
    %v777 = vadd.f32 0.0, %v776
    %v778 = vpop.f32.mrb[0].mxu0
    %v779 = vadd.f32 0.0, %v778
    %v780 = vpop.f32.mrb[0].mxu0
    %v781 = vadd.f32 0.0, %v780
    %v782 = vpop.f32.mrb[0].mxu0
    %v783 = vadd.f32 0.0, %v782
    %784 = vmatprep.mubr.bf16.mxu0 %v273
    %785 = vmatmul.mubr.bf16.gmra.mrb[0].mxu0 %v272
    %v786 = vpop.f32.mrb[0].mxu0
    %v787 = vadd.f32 0.0, %v786
    %v788 = vpop.f32.mrb[0].mxu0
    %v789 = vadd.f32 0.0, %v788
    %v790 = vpop.f32.mrb[0].mxu0
    %v791 = vadd.f32 0.0, %v790
    %v792 = vpop.f32.mrb[0].mxu0
    %v793 = vadd.f32 0.0, %v792
    %794 = vmatprep.mubr.bf16.mxu0 %v275
    %795 = vmatmul.mubr.bf16.gmra.mrb[0].mxu0 %v274
    %v796 = vpop.f32.mrb[0].mxu0
    %v797 = vadd.f32 0.0, %v796
    %v798 = vpop.f32.mrb[0].mxu0
    %v799 = vadd.f32 0.0, %v798
    %v800 = vpop.f32.mrb[0].mxu0
    %v801 = vadd.f32 0.0, %v800
    %v802 = vpop.f32.mrb[0].mxu0
    %v803 = vadd.f32 0.0, %v802
    %804 = vmatprep.mubr.bf16.mxu0 %v277
    %805 = vmatmul.mubr.bf16.gmra.mrb[0].mxu0 %v276
    %v806 = vpop.f32.mrb[0].mxu0
    %v807 = vadd.f32 0.0, %v806
    %v808 = vpop.f32.mrb[0].mxu0
    %v809 = vadd.f32 0.0, %v808
    %v810 = vpop.f32.mrb[0].mxu0
    %v811 = vadd.f32 0.0, %v810
    %v812 = vpop.f32.mrb[0].mxu0
    %v813 = vadd.f32 0.0, %v812
    %814 = vmatprep.mubr.bf16.mxu0 %v279
    %815 = vmatmul.mubr.bf16.gmra.mrb[0].mxu0 %v278
    %v816 = vpop.f32.mrb[0].mxu0
    %v817 = vadd.f32 0.0, %v816
    %v818 = vpop.f32.mrb[0].mxu0
    %v819 = vadd.f32 0.0, %v818
    %v820 = vpop.f32.mrb[0].mxu0
    %v821 = vadd.f32 0.0, %v820
    %v822 = vpop.f32.mrb[0].mxu0
    %v823 = vadd.f32 0.0, %v822
    %824 = vdwg.mxu0
    %825 = vmatprep.subr.bf16.mxu0 %v537
    %826 = vmatpush1.bf16.xpose.msra.mxu0 %v536
    %827 = vmatprep.subr.bf16.mxu0 %v539
    %828 = vmatpush1.bf16.xpose.msra.mxu0 %v538
    %829 = vmatprep.subr.bf16.mxu0 %v541
    %830 = vmatpush1.bf16.xpose.msra.mxu0 %v540
    %831 = vmatprep.subr.bf16.mxu0 %v543
    %832 = vmatpush1.bf16.xpose.msra.mxu0 %v542
    %833 = vmatprep.subr.bf16.mxu0 %v545
    %834 = vmatpush1.bf16.xpose.msra.mxu0 %v544
    %835 = vmatprep.subr.bf16.mxu0 %v547
    %836 = vmatpush1.bf16.xpose.msra.mxu0 %v546
    %837 = vmatprep.subr.bf16.mxu0 %v549
    %838 = vmatpush1.bf16.xpose.msra.mxu0 %v548
    %839 = vmatprep.subr.bf16.mxu0 %v551
    %840 = vmatpush1.bf16.xpose.msra.mxu0 %v550
    %841 = vmatprep.subr.bf16.mxu0 %v553
    %842 = vmatpush1.bf16.xpose.msra.mxu0 %v552
    %843 = vmatprep.subr.bf16.mxu0 %v555
    %844 = vmatpush1.bf16.xpose.msra.mxu0 %v554
    %845 = vmatprep.subr.bf16.mxu0 %v557
    %846 = vmatpush1.bf16.xpose.msra.mxu0 %v556
    %847 = vmatprep.subr.bf16.mxu0 %v559
    %848 = vmatpush1.bf16.xpose.msra.mxu0 %v558
    %849 = vmatprep.subr.bf16.mxu0 %v561
    %850 = vmatpush1.bf16.xpose.msra.mxu0 %v560
    %851 = vmatprep.subr.bf16.mxu0 %v563
    %852 = vmatpush1.bf16.xpose.msra.mxu0 %v562
    %853 = vmatprep.subr.bf16.mxu0 %v565
    %854 = vmatpush1.bf16.xpose.msra.mxu0 %v564
    %855 = vmatprep.subr.bf16.mxu0 %v567
    %856 = vmatpush1.bf16.xpose.msra.mxu0 %v566
    %857 = vmatprep.mubr.bf16.mxu0 %v249
    %858 = vmatmul.mubr.bf16.gmra.mrb[0].mxu0 %v248
    %v859 = vpop.f32.mrb[0].mxu0
    %v860 = vadd.f32 0.0, %v859
    %v861 = vpop.f32.mrb[0].mxu0
    %v862 = vadd.f32 0.0, %v861
    %v863 = vpop.f32.mrb[0].mxu0
    %v864 = vadd.f32 0.0, %v863
    %v865 = vpop.f32.mrb[0].mxu0
    %v866 = vadd.f32 0.0, %v865
    %867 = vmatprep.mubr.bf16.mxu0 %v251
    %868 = vmatmul.mubr.bf16.gmra.mrb[0].mxu0 %v250
    %v869 = vpop.f32.mrb[0].mxu0
    %v870 = vadd.f32 0.0, %v869
    %v871 = vpop.f32.mrb[0].mxu0
    %v872 = vadd.f32 0.0, %v871
    %v873 = vpop.f32.mrb[0].mxu0
    %v874 = vadd.f32 0.0, %v873
    %v875 = vpop.f32.mrb[0].mxu0
    %v876 = vadd.f32 0.0, %v875
    %877 = vmatprep.mubr.bf16.mxu0 %v253
    %878 = vmatmul.mubr.bf16.gmra.mrb[0].mxu0 %v252
    %v879 = vpop.f32.mrb[0].mxu0
    %v880 = vadd.f32 0.0, %v879
    %v881 = vpop.f32.mrb[0].mxu0
    %v882 = vadd.f32 0.0, %v881
    %v883 = vpop.f32.mrb[0].mxu0
    %v884 = vadd.f32 0.0, %v883
    %v885 = vpop.f32.mrb[0].mxu0
    %v886 = vadd.f32 0.0, %v885
    %887 = vmatprep.mubr.bf16.mxu0 %v255
    %888 = vmatmul.mubr.bf16.gmra.mrb[0].mxu0 %v254
    %v889 = vpop.f32.mrb[0].mxu0
    %v890 = vadd.f32 0.0, %v889
    %v891 = vpop.f32.mrb[0].mxu0
    %v892 = vadd.f32 0.0, %v891
    %v893 = vpop.f32.mrb[0].mxu0
    %v894 = vadd.f32 0.0, %v893
    %v895 = vpop.f32.mrb[0].mxu0
    %v896 = vadd.f32 0.0, %v895
    %897 = vmatprep.mubr.bf16.mxu0 %v257
    %898 = vmatmul.mubr.bf16.gmra.mrb[0].mxu0 %v256
    %v899 = vpop.f32.mrb[0].mxu0
    %v900 = vadd.f32 0.0, %v899
    %v901 = vpop.f32.mrb[0].mxu0
    %v902 = vadd.f32 0.0, %v901
    %v903 = vpop.f32.mrb[0].mxu0
    %v904 = vadd.f32 0.0, %v903
    %v905 = vpop.f32.mrb[0].mxu0
    %v906 = vadd.f32 0.0, %v905
    %907 = vmatprep.mubr.bf16.mxu0 %v259
    %908 = vmatmul.mubr.bf16.gmra.mrb[0].mxu0 %v258
    %v909 = vpop.f32.mrb[0].mxu0
    %v910 = vadd.f32 0.0, %v909
    %v911 = vpop.f32.mrb[0].mxu0
    %v912 = vadd.f32 0.0, %v911
    %v913 = vpop.f32.mrb[0].mxu0
    %v914 = vadd.f32 0.0, %v913
    %v915 = vpop.f32.mrb[0].mxu0
    %v916 = vadd.f32 0.0, %v915
    %917 = vmatprep.mubr.bf16.mxu0 %v261
    %918 = vmatmul.mubr.bf16.gmra.mrb[0].mxu0 %v260
    %v919 = vpop.f32.mrb[0].mxu0
    %v920 = vadd.f32 0.0, %v919
    %v921 = vpop.f32.mrb[0].mxu0
    %v922 = vadd.f32 0.0, %v921
    %v923 = vpop.f32.mrb[0].mxu0
    %v924 = vadd.f32 0.0, %v923
    %v925 = vpop.f32.mrb[0].mxu0
    %v926 = vadd.f32 0.0, %v925
    %927 = vmatprep.mubr.bf16.mxu0 %v263
    %928 = vmatmul.mubr.bf16.gmra.mrb[0].mxu0 %v262
    %v929 = vpop.f32.mrb[0].mxu0
    %v930 = vadd.f32 0.0, %v929
    %v931 = vpop.f32.mrb[0].mxu0
    %v932 = vadd.f32 0.0, %v931
    %v933 = vpop.f32.mrb[0].mxu0
    %v934 = vadd.f32 0.0, %v933
    %v935 = vpop.f32.mrb[0].mxu0
    %v936 = vadd.f32 0.0, %v935
    %937 = vmatprep.mubr.bf16.mxu0 %v265
    %938 = vmatmul.mubr.bf16.gmra.mrb[0].mxu0 %v264
    %v939 = vpop.f32.mrb[0].mxu0
    %v940 = vadd.f32 0.0, %v939
    %v941 = vpop.f32.mrb[0].mxu0
    %v942 = vadd.f32 0.0, %v941
    %v943 = vpop.f32.mrb[0].mxu0
    %v944 = vadd.f32 0.0, %v943
    %v945 = vpop.f32.mrb[0].mxu0
    %v946 = vadd.f32 0.0, %v945
    %947 = vmatprep.mubr.bf16.mxu0 %v267
    %948 = vmatmul.mubr.bf16.gmra.mrb[0].mxu0 %v266
    %v949 = vpop.f32.mrb[0].mxu0
    %v950 = vadd.f32 0.0, %v949
    %v951 = vpop.f32.mrb[0].mxu0
    %v952 = vadd.f32 0.0, %v951
    %v953 = vpop.f32.mrb[0].mxu0
    %v954 = vadd.f32 0.0, %v953
    %v955 = vpop.f32.mrb[0].mxu0
    %v956 = vadd.f32 0.0, %v955
    %957 = vmatprep.mubr.bf16.mxu0 %v269
    %958 = vmatmul.mubr.bf16.gmra.mrb[0].mxu0 %v268
    %v959 = vpop.f32.mrb[0].mxu0
    %v960 = vadd.f32 0.0, %v959
    %v961 = vpop.f32.mrb[0].mxu0
    %v962 = vadd.f32 0.0, %v961
    %v963 = vpop.f32.mrb[0].mxu0
    %v964 = vadd.f32 0.0, %v963
    %v965 = vpop.f32.mrb[0].mxu0
    %v966 = vadd.f32 0.0, %v965
    %967 = vmatprep.mubr.bf16.mxu0 %v271
    %968 = vmatmul.mubr.bf16.gmra.mrb[0].mxu0 %v270
    %v969 = vpop.f32.mrb[0].mxu0
    %v970 = vadd.f32 0.0, %v969
    %v971 = vpop.f32.mrb[0].mxu0
    %v972 = vadd.f32 0.0, %v971
    %v973 = vpop.f32.mrb[0].mxu0
    %v974 = vadd.f32 0.0, %v973
    %v975 = vpop.f32.mrb[0].mxu0
    %v976 = vadd.f32 0.0, %v975
    %977 = vmatprep.mubr.bf16.mxu0 %v273
    %978 = vmatmul.mubr.bf16.gmra.mrb[0].mxu0 %v272
    %v979 = vpop.f32.mrb[0].mxu0
    %v980 = vadd.f32 0.0, %v979
    %v981 = vpop.f32.mrb[0].mxu0
    %v982 = vadd.f32 0.0, %v981
    %v983 = vpop.f32.mrb[0].mxu0
    %v984 = vadd.f32 0.0, %v983
    %v985 = vpop.f32.mrb[0].mxu0
    %v986 = vadd.f32 0.0, %v985
    %987 = vmatprep.mubr.bf16.mxu0 %v275
    %988 = vmatmul.mubr.bf16.gmra.mrb[0].mxu0 %v274
    %v989 = vpop.f32.mrb[0].mxu0
    %v990 = vadd.f32 0.0, %v989
    %v991 = vpop.f32.mrb[0].mxu0
    %v992 = vadd.f32 0.0, %v991
    %v993 = vpop.f32.mrb[0].mxu0
    %v994 = vadd.f32 0.0, %v993
    %v995 = vpop.f32.mrb[0].mxu0
    %v996 = vadd.f32 0.0, %v995
    %997 = vmatprep.mubr.bf16.mxu0 %v277
    %998 = vmatmul.mubr.bf16.gmra.mrb[0].mxu0 %v276
    %v999 = vpop.f32.mrb[0].mxu0
    %v1000 = vadd.f32 0.0, %v999
    %v1001 = vpop.f32.mrb[0].mxu0
    %v1002 = vadd.f32 0.0, %v1001
    %v1003 = vpop.f32.mrb[0].mxu0
    %v1004 = vadd.f32 0.0, %v1003
    %v1005 = vpop.f32.mrb[0].mxu0
    %v1006 = vadd.f32 0.0, %v1005
    %1007 = vmatprep.mubr.bf16.mxu0 %v279
    %1008 = vmatmul.mubr.bf16.gmra.mrb[0].mxu0 %v278
    %v1009 = vpop.f32.mrb[0].mxu0
    %v1010 = vadd.f32 0.0, %v1009
    %v1011 = vpop.f32.mrb[0].mxu0
    %v1012 = vadd.f32 0.0, %v1011
    %v1013 = vpop.f32.mrb[0].mxu0
    %v1014 = vadd.f32 0.0, %v1013
    %v1015 = vpop.f32.mrb[0].mxu0
    %v1016 = vadd.f32 0.0, %v1015
    %1017 = vdwg.mxu0
    %v1018 = vmax.f32 %v667, 0.0
    %v1019 = vmax.f32 %v669, 0.0
    %v1020 = vmax.f32 %v860, 0.0
    %v1021 = vmax.f32 %v862, 0.0
    %v1022 = vmax.f32 %v671, 0.0
    %v1023 = vmax.f32 %v673, 0.0
    %v1024 = vmax.f32 %v864, 0.0
    %v1025 = vmax.f32 %v866, 0.0
    %v1026 = vmax.f32 %v677, 0.0
    %v1027 = vmax.f32 %v679, 0.0
    %v1028 = vmax.f32 %v870, 0.0
    %v1029 = vmax.f32 %v872, 0.0
    %v1030 = vmax.f32 %v681, 0.0
    %v1031 = vmax.f32 %v683, 0.0
    %v1032 = vmax.f32 %v874, 0.0
    %v1033 = vmax.f32 %v876, 0.0
    %v1034 = vmax.f32 %v687, 0.0
    %v1035 = vmax.f32 %v689, 0.0
    %v1036 = vmax.f32 %v880, 0.0
    %v1037 = vmax.f32 %v882, 0.0
    %v1038 = vmax.f32 %v691, 0.0
    %v1039 = vmax.f32 %v693, 0.0
    %v1040 = vmax.f32 %v884, 0.0
    %v1041 = vmax.f32 %v886, 0.0
    %v1042 = vmax.f32 %v697, 0.0
    %v1043 = vmax.f32 %v699, 0.0
    %v1044 = vmax.f32 %v890, 0.0
    %v1045 = vmax.f32 %v892, 0.0
    %v1046 = vmax.f32 %v701, 0.0
    %v1047 = vmax.f32 %v703, 0.0
    %v1048 = vmax.f32 %v894, 0.0
    %v1049 = vmax.f32 %v896, 0.0
    %v1050 = vmax.f32 %v707, 0.0
    %v1051 = vmax.f32 %v709, 0.0
    %v1052 = vmax.f32 %v900, 0.0
    %v1053 = vmax.f32 %v902, 0.0
    %v1054 = vmax.f32 %v711, 0.0
    %v1055 = vmax.f32 %v713, 0.0
    %v1056 = vmax.f32 %v904, 0.0
    %v1057 = vmax.f32 %v906, 0.0
    %v1058 = vmax.f32 %v717, 0.0
    %v1059 = vmax.f32 %v719, 0.0
    %v1060 = vmax.f32 %v910, 0.0
    %v1061 = vmax.f32 %v912, 0.0
    %v1062 = vmax.f32 %v721, 0.0
    %v1063 = vmax.f32 %v723, 0.0
    %v1064 = vmax.f32 %v914, 0.0
    %v1065 = vmax.f32 %v916, 0.0
    %v1066 = vmax.f32 %v727, 0.0
    %v1067 = vmax.f32 %v729, 0.0
    %v1068 = vmax.f32 %v920, 0.0
    %v1069 = vmax.f32 %v922, 0.0
    %v1070 = vmax.f32 %v731, 0.0
    %v1071 = vmax.f32 %v733, 0.0
    %v1072 = vmax.f32 %v924, 0.0
    %v1073 = vmax.f32 %v926, 0.0
    %v1074 = vmax.f32 %v737, 0.0
    %v1075 = vmax.f32 %v739, 0.0
    %v1076 = vmax.f32 %v930, 0.0
    %v1077 = vmax.f32 %v932, 0.0
    %v1078 = vmax.f32 %v741, 0.0
    %v1079 = vmax.f32 %v743, 0.0
    %v1080 = vmax.f32 %v934, 0.0
    %v1081 = vmax.f32 %v936, 0.0
    %v1082 = vmax.f32 %v747, 0.0
    %v1083 = vmax.f32 %v749, 0.0
    %v1084 = vmax.f32 %v940, 0.0
    %v1085 = vmax.f32 %v942, 0.0
    %v1086 = vmax.f32 %v751, 0.0
    %v1087 = vmax.f32 %v753, 0.0
    %v1088 = vmax.f32 %v944, 0.0
    %v1089 = vmax.f32 %v946, 0.0
    %v1090 = vmax.f32 %v757, 0.0
    %v1091 = vmax.f32 %v759, 0.0
    %v1092 = vmax.f32 %v950, 0.0
    %v1093 = vmax.f32 %v952, 0.0
    %v1094 = vmax.f32 %v761, 0.0
    %v1095 = vmax.f32 %v763, 0.0
    %v1096 = vmax.f32 %v954, 0.0
    %v1097 = vmax.f32 %v956, 0.0
    %v1098 = vmax.f32 %v767, 0.0
    %v1099 = vmax.f32 %v769, 0.0
    %v1100 = vmax.f32 %v960, 0.0
    %v1101 = vmax.f32 %v962, 0.0
    %v1102 = vmax.f32 %v771, 0.0
    %v1103 = vmax.f32 %v773, 0.0
    %v1104 = vmax.f32 %v964, 0.0
    %v1105 = vmax.f32 %v966, 0.0
    %v1106 = vmax.f32 %v777, 0.0
    %v1107 = vmax.f32 %v779, 0.0
    %v1108 = vmax.f32 %v970, 0.0
    %v1109 = vmax.f32 %v972, 0.0
    %v1110 = vmax.f32 %v781, 0.0
    %v1111 = vmax.f32 %v783, 0.0
    %v1112 = vmax.f32 %v974, 0.0
    %v1113 = vmax.f32 %v976, 0.0
    %v1114 = vmax.f32 %v787, 0.0
    %v1115 = vmax.f32 %v789, 0.0
    %v1116 = vmax.f32 %v980, 0.0
    %v1117 = vmax.f32 %v982, 0.0
    %v1118 = vmax.f32 %v791, 0.0
    %v1119 = vmax.f32 %v793, 0.0
    %v1120 = vmax.f32 %v984, 0.0
    %v1121 = vmax.f32 %v986, 0.0
    %v1122 = vmax.f32 %v797, 0.0
    %v1123 = vmax.f32 %v799, 0.0
    %v1124 = vmax.f32 %v990, 0.0
    %v1125 = vmax.f32 %v992, 0.0
    %v1126 = vmax.f32 %v801, 0.0
    %v1127 = vmax.f32 %v803, 0.0
    %v1128 = vmax.f32 %v994, 0.0
    %v1129 = vmax.f32 %v996, 0.0
    %v1130 = vmax.f32 %v807, 0.0
    %v1131 = vmax.f32 %v809, 0.0
    %v1132 = vmax.f32 %v1000, 0.0
    %v1133 = vmax.f32 %v1002, 0.0
    %v1134 = vmax.f32 %v811, 0.0
    %v1135 = vmax.f32 %v813, 0.0
    %v1136 = vmax.f32 %v1004, 0.0
    %v1137 = vmax.f32 %v1006, 0.0
    %v1138 = vmax.f32 %v817, 0.0
    %v1139 = vmax.f32 %v819, 0.0
    %v1140 = vmax.f32 %v1010, 0.0
    %v1141 = vmax.f32 %v1012, 0.0
    %v1142 = vmax.f32 %v821, 0.0
    %v1143 = vmax.f32 %v823, 0.0
    %v1144 = vmax.f32 %v1014, 0.0
    %v1145 = vmax.f32 %v1016, 0.0
    %v1146 = vmul.f32 %v1018, %v1018
    %v1147 = vmul.f32 %v1019, %v1019
    %v1148 = vmul.f32 %v1020, %v1020
    %v1149 = vmul.f32 %v1021, %v1021
    %v1150 = vmul.f32 %v1022, %v1022
    %v1151 = vmul.f32 %v1023, %v1023
    %v1152 = vmul.f32 %v1024, %v1024
    %v1153 = vmul.f32 %v1025, %v1025
    %v1154 = vmul.f32 %v1026, %v1026
    %v1155 = vmul.f32 %v1027, %v1027
    %v1156 = vmul.f32 %v1028, %v1028
    %v1157 = vmul.f32 %v1029, %v1029
    %v1158 = vmul.f32 %v1030, %v1030
    %v1159 = vmul.f32 %v1031, %v1031
    %v1160 = vmul.f32 %v1032, %v1032
    %v1161 = vmul.f32 %v1033, %v1033
    %v1162 = vmul.f32 %v1034, %v1034
    %v1163 = vmul.f32 %v1035, %v1035
    %v1164 = vmul.f32 %v1036, %v1036
    %v1165 = vmul.f32 %v1037, %v1037
    %v1166 = vmul.f32 %v1038, %v1038
    %v1167 = vmul.f32 %v1039, %v1039
    %v1168 = vmul.f32 %v1040, %v1040
    %v1169 = vmul.f32 %v1041, %v1041
    %v1170 = vmul.f32 %v1042, %v1042
    %v1171 = vmul.f32 %v1043, %v1043
    %v1172 = vmul.f32 %v1044, %v1044
    %v1173 = vmul.f32 %v1045, %v1045
    %v1174 = vmul.f32 %v1046, %v1046
    %v1175 = vmul.f32 %v1047, %v1047
    %v1176 = vmul.f32 %v1048, %v1048
    %v1177 = vmul.f32 %v1049, %v1049
    %v1178 = vmul.f32 %v1050, %v1050
    %v1179 = vmul.f32 %v1051, %v1051
    %v1180 = vmul.f32 %v1052, %v1052
    %v1181 = vmul.f32 %v1053, %v1053
    %v1182 = vmul.f32 %v1054, %v1054
    %v1183 = vmul.f32 %v1055, %v1055
    %v1184 = vmul.f32 %v1056, %v1056
    %v1185 = vmul.f32 %v1057, %v1057
    %v1186 = vmul.f32 %v1058, %v1058
    %v1187 = vmul.f32 %v1059, %v1059
    %v1188 = vmul.f32 %v1060, %v1060
    %v1189 = vmul.f32 %v1061, %v1061
    %v1190 = vmul.f32 %v1062, %v1062
    %v1191 = vmul.f32 %v1063, %v1063
    %v1192 = vmul.f32 %v1064, %v1064
    %v1193 = vmul.f32 %v1065, %v1065
    %v1194 = vmul.f32 %v1066, %v1066
    %v1195 = vmul.f32 %v1067, %v1067
    %v1196 = vmul.f32 %v1068, %v1068
    %v1197 = vmul.f32 %v1069, %v1069
    %v1198 = vmul.f32 %v1070, %v1070
    %v1199 = vmul.f32 %v1071, %v1071
    %v1200 = vmul.f32 %v1072, %v1072
    %v1201 = vmul.f32 %v1073, %v1073
    %v1202 = vmul.f32 %v1074, %v1074
    %v1203 = vmul.f32 %v1075, %v1075
    %v1204 = vmul.f32 %v1076, %v1076
    %v1205 = vmul.f32 %v1077, %v1077
    %v1206 = vmul.f32 %v1078, %v1078
    %v1207 = vmul.f32 %v1079, %v1079
    %v1208 = vmul.f32 %v1080, %v1080
    %v1209 = vmul.f32 %v1081, %v1081
    %v1210 = vmul.f32 %v1082, %v1082
    %v1211 = vmul.f32 %v1083, %v1083
    %v1212 = vmul.f32 %v1084, %v1084
    %v1213 = vmul.f32 %v1085, %v1085
    %v1214 = vmul.f32 %v1086, %v1086
    %v1215 = vmul.f32 %v1087, %v1087
    %v1216 = vmul.f32 %v1088, %v1088
    %v1217 = vmul.f32 %v1089, %v1089
    %v1218 = vmul.f32 %v1090, %v1090
    %v1219 = vmul.f32 %v1091, %v1091
    %v1220 = vmul.f32 %v1092, %v1092
    %v1221 = vmul.f32 %v1093, %v1093
    %v1222 = vmul.f32 %v1094, %v1094
    %v1223 = vmul.f32 %v1095, %v1095
    %v1224 = vmul.f32 %v1096, %v1096
    %v1225 = vmul.f32 %v1097, %v1097
    %v1226 = vmul.f32 %v1098, %v1098
    %v1227 = vmul.f32 %v1099, %v1099
    %v1228 = vmul.f32 %v1100, %v1100
    %v1229 = vmul.f32 %v1101, %v1101
    %v1230 = vmul.f32 %v1102, %v1102
    %v1231 = vmul.f32 %v1103, %v1103
    %v1232 = vmul.f32 %v1104, %v1104
    %v1233 = vmul.f32 %v1105, %v1105
    %v1234 = vmul.f32 %v1106, %v1106
    %v1235 = vmul.f32 %v1107, %v1107
    %v1236 = vmul.f32 %v1108, %v1108
    %v1237 = vmul.f32 %v1109, %v1109
    %v1238 = vmul.f32 %v1110, %v1110
    %v1239 = vmul.f32 %v1111, %v1111
    %v1240 = vmul.f32 %v1112, %v1112
    %v1241 = vmul.f32 %v1113, %v1113
    %v1242 = vmul.f32 %v1114, %v1114
    %v1243 = vmul.f32 %v1115, %v1115
    %v1244 = vmul.f32 %v1116, %v1116
    %v1245 = vmul.f32 %v1117, %v1117
    %v1246 = vmul.f32 %v1118, %v1118
    %v1247 = vmul.f32 %v1119, %v1119
    %v1248 = vmul.f32 %v1120, %v1120
    %v1249 = vmul.f32 %v1121, %v1121
    %v1250 = vmul.f32 %v1122, %v1122
    %v1251 = vmul.f32 %v1123, %v1123
    %v1252 = vmul.f32 %v1124, %v1124
    %v1253 = vmul.f32 %v1125, %v1125
    %v1254 = vmul.f32 %v1126, %v1126
    %v1255 = vmul.f32 %v1127, %v1127
    %v1256 = vmul.f32 %v1128, %v1128
    %v1257 = vmul.f32 %v1129, %v1129
    %v1258 = vmul.f32 %v1130, %v1130
    %v1259 = vmul.f32 %v1131, %v1131
    %v1260 = vmul.f32 %v1132, %v1132
    %v1261 = vmul.f32 %v1133, %v1133
    %v1262 = vmul.f32 %v1134, %v1134
    %v1263 = vmul.f32 %v1135, %v1135
    %v1264 = vmul.f32 %v1136, %v1136
    %v1265 = vmul.f32 %v1137, %v1137
    %v1266 = vmul.f32 %v1138, %v1138
    %v1267 = vmul.f32 %v1139, %v1139
    %v1268 = vmul.f32 %v1140, %v1140
    %v1269 = vmul.f32 %v1141, %v1141
    %v1270 = vmul.f32 %v1142, %v1142
    %v1271 = vmul.f32 %v1143, %v1143
    %v1272 = vmul.f32 %v1144, %v1144
    %v1273 = vmul.f32 %v1145, %v1145
    %v1274 = vpack.c.bf16 %v1150, %v1146
    %v1275 = vpack.c.bf16 %v1151, %v1147
    %v1276 = vpack.c.bf16 %v1152, %v1148
    %v1277 = vpack.c.bf16 %v1153, %v1149
    %v1278 = vpack.c.bf16 %v1158, %v1154
    %v1279 = vpack.c.bf16 %v1159, %v1155
    %v1280 = vpack.c.bf16 %v1160, %v1156
    %v1281 = vpack.c.bf16 %v1161, %v1157
    %v1282 = vpack.c.bf16 %v1166, %v1162
    %v1283 = vpack.c.bf16 %v1167, %v1163
    %v1284 = vpack.c.bf16 %v1168, %v1164
    %v1285 = vpack.c.bf16 %v1169, %v1165
    %v1286 = vpack.c.bf16 %v1174, %v1170
    %v1287 = vpack.c.bf16 %v1175, %v1171
    %v1288 = vpack.c.bf16 %v1176, %v1172
    %v1289 = vpack.c.bf16 %v1177, %v1173
    %v1290 = vpack.c.bf16 %v1182, %v1178
    %v1291 = vpack.c.bf16 %v1183, %v1179
    %v1292 = vpack.c.bf16 %v1184, %v1180
    %v1293 = vpack.c.bf16 %v1185, %v1181
    %v1294 = vpack.c.bf16 %v1190, %v1186
    %v1295 = vpack.c.bf16 %v1191, %v1187
    %v1296 = vpack.c.bf16 %v1192, %v1188
    %v1297 = vpack.c.bf16 %v1193, %v1189
    %v1298 = vpack.c.bf16 %v1198, %v1194
    %v1299 = vpack.c.bf16 %v1199, %v1195
    %v1300 = vpack.c.bf16 %v1200, %v1196
    %v1301 = vpack.c.bf16 %v1201, %v1197
    %v1302 = vpack.c.bf16 %v1206, %v1202
    %v1303 = vpack.c.bf16 %v1207, %v1203
    %v1304 = vpack.c.bf16 %v1208, %v1204
    %v1305 = vpack.c.bf16 %v1209, %v1205
    %v1306 = vpack.c.bf16 %v1214, %v1210
    %v1307 = vpack.c.bf16 %v1215, %v1211
    %v1308 = vpack.c.bf16 %v1216, %v1212
    %v1309 = vpack.c.bf16 %v1217, %v1213
    %v1310 = vpack.c.bf16 %v1222, %v1218
    %v1311 = vpack.c.bf16 %v1223, %v1219
    %v1312 = vpack.c.bf16 %v1224, %v1220
    %v1313 = vpack.c.bf16 %v1225, %v1221
    %v1314 = vpack.c.bf16 %v1230, %v1226
    %v1315 = vpack.c.bf16 %v1231, %v1227
    %v1316 = vpack.c.bf16 %v1232, %v1228
    %v1317 = vpack.c.bf16 %v1233, %v1229
    %v1318 = vpack.c.bf16 %v1238, %v1234
    %v1319 = vpack.c.bf16 %v1239, %v1235
    %v1320 = vpack.c.bf16 %v1240, %v1236
    %v1321 = vpack.c.bf16 %v1241, %v1237
    %v1322 = vpack.c.bf16 %v1246, %v1242
    %v1323 = vpack.c.bf16 %v1247, %v1243
    %v1324 = vpack.c.bf16 %v1248, %v1244
    %v1325 = vpack.c.bf16 %v1249, %v1245
    %v1326 = vpack.c.bf16 %v1254, %v1250
    %v1327 = vpack.c.bf16 %v1255, %v1251
    %v1328 = vpack.c.bf16 %v1256, %v1252
    %v1329 = vpack.c.bf16 %v1257, %v1253
    %v1330 = vpack.c.bf16 %v1262, %v1258
    %v1331 = vpack.c.bf16 %v1263, %v1259
    %v1332 = vpack.c.bf16 %v1264, %v1260
    %v1333 = vpack.c.bf16 %v1265, %v1261
    %v1334 = vpack.c.bf16 %v1270, %v1266
    %v1335 = vpack.c.bf16 %v1271, %v1267
    %v1336 = vpack.c.bf16 %v1272, %v1268
    %v1337 = vpack.c.bf16 %v1273, %v1269
    %v1338 = vld [vmem:[#allocation7] sm:$0xff]
    %v1339 = vld [vmem:[#allocation7 + $0x8] sm:$0xff]
    %v1340 = vld [vmem:[#allocation7 + $0x10] sm:$0xff]
    %v1341 = vld [vmem:[#allocation7 + $0x18] sm:$0xff]
    %v1342 = vld [vmem:[#allocation7 + $0x20] sm:$0xff]
    %v1343 = vld [vmem:[#allocation7 + $0x28] sm:$0xff]
    %v1344 = vld [vmem:[#allocation7 + $0x30] sm:$0xff]
    %v1345 = vld [vmem:[#allocation7 + $0x38] sm:$0xff]
    %v1346 = vld [vmem:[#allocation7 + $0x40] sm:$0xff]
    %v1347 = vld [vmem:[#allocation7 + $0x48] sm:$0xff]
    %v1348 = vld [vmem:[#allocation7 + $0x50] sm:$0xff]
    %v1349 = vld [vmem:[#allocation7 + $0x58] sm:$0xff]
    %v1350 = vld [vmem:[#allocation7 + $0x60] sm:$0xff]
    %v1351 = vld [vmem:[#allocation7 + $0x68] sm:$0xff]
    %v1352 = vld [vmem:[#allocation7 + $0x70] sm:$0xff]
    %v1353 = vld [vmem:[#allocation7 + $0x78] sm:$0xff]
    %v1354 = vld [vmem:[#allocation7 + $0x80] sm:$0xff]
    %v1355 = vld [vmem:[#allocation7 + $0x88] sm:$0xff]
    %v1356 = vld [vmem:[#allocation7 + $0x90] sm:$0xff]
    %v1357 = vld [vmem:[#allocation7 + $0x98] sm:$0xff]
    %v1358 = vld [vmem:[#allocation7 + $0xa0] sm:$0xff]
    %v1359 = vld [vmem:[#allocation7 + $0xa8] sm:$0xff]
    %v1360 = vld [vmem:[#allocation7 + $0xb0] sm:$0xff]
    %v1361 = vld [vmem:[#allocation7 + $0xb8] sm:$0xff]
    %v1362 = vld [vmem:[#allocation7 + $0xc0] sm:$0xff]
    %v1363 = vld [vmem:[#allocation7 + $0xc8] sm:$0xff]
    %v1364 = vld [vmem:[#allocation7 + $0xd0] sm:$0xff]
    %v1365 = vld [vmem:[#allocation7 + $0xd8] sm:$0xff]
    %v1366 = vld [vmem:[#allocation7 + $0xe0] sm:$0xff]
    %v1367 = vld [vmem:[#allocation7 + $0xe8] sm:$0xff]
    %v1368 = vld [vmem:[#allocation7 + $0xf0] sm:$0xff]
    %v1369 = vld [vmem:[#allocation7 + $0xf8] sm:$0xff]
    %v1370 = vld [vmem:[#allocation7 + $0x100] sm:$0xff]
    %v1371 = vld [vmem:[#allocation7 + $0x108] sm:$0xff]
    %v1372 = vld [vmem:[#allocation7 + $0x110] sm:$0xff]
    %v1373 = vld [vmem:[#allocation7 + $0x118] sm:$0xff]
    %v1374 = vld [vmem:[#allocation7 + $0x120] sm:$0xff]
    %v1375 = vld [vmem:[#allocation7 + $0x128] sm:$0xff]
    %v1376 = vld [vmem:[#allocation7 + $0x130] sm:$0xff]
    %v1377 = vld [vmem:[#allocation7 + $0x138] sm:$0xff]
    %v1378 = vld [vmem:[#allocation7 + $0x140] sm:$0xff]
    %v1379 = vld [vmem:[#allocation7 + $0x148] sm:$0xff]
    %v1380 = vld [vmem:[#allocation7 + $0x150] sm:$0xff]
    %v1381 = vld [vmem:[#allocation7 + $0x158] sm:$0xff]
    %v1382 = vld [vmem:[#allocation7 + $0x160] sm:$0xff]
    %v1383 = vld [vmem:[#allocation7 + $0x168] sm:$0xff]
    %v1384 = vld [vmem:[#allocation7 + $0x170] sm:$0xff]
    %v1385 = vld [vmem:[#allocation7 + $0x178] sm:$0xff]
    %v1386 = vld [vmem:[#allocation7 + $0x180] sm:$0xff]
    %v1387 = vld [vmem:[#allocation7 + $0x188] sm:$0xff]
    %v1388 = vld [vmem:[#allocation7 + $0x190] sm:$0xff]
    %v1389 = vld [vmem:[#allocation7 + $0x198] sm:$0xff]
    %v1390 = vld [vmem:[#allocation7 + $0x1a0] sm:$0xff]
    %v1391 = vld [vmem:[#allocation7 + $0x1a8] sm:$0xff]
    %v1392 = vld [vmem:[#allocation7 + $0x1b0] sm:$0xff]
    %v1393 = vld [vmem:[#allocation7 + $0x1b8] sm:$0xff]
    %v1394 = vld [vmem:[#allocation7 + $0x1c0] sm:$0xff]
    %v1395 = vld [vmem:[#allocation7 + $0x1c8] sm:$0xff]
    %v1396 = vld [vmem:[#allocation7 + $0x1d0] sm:$0xff]
    %v1397 = vld [vmem:[#allocation7 + $0x1d8] sm:$0xff]
    %v1398 = vld [vmem:[#allocation7 + $0x1e0] sm:$0xff]
    %v1399 = vld [vmem:[#allocation7 + $0x1e8] sm:$0xff]
    %v1400 = vld [vmem:[#allocation7 + $0x1f0] sm:$0xff]
    %v1401 = vld [vmem:[#allocation7 + $0x1f8] sm:$0xff]
    %v1466 = vunpack.c.l.b16 %v1338
    %v1467 = vunpack.c.h.b16 %v1338
    %v1468 = vunpack.c.l.b16 %v1339
    %v1469 = vunpack.c.h.b16 %v1339
    %v1470 = vunpack.c.l.b16 %v1340
    %v1471 = vunpack.c.h.b16 %v1340
    %v1472 = vunpack.c.l.b16 %v1341
    %v1473 = vunpack.c.h.b16 %v1341
    %v1474 = vunpack.c.l.b16 %v1342
    %v1475 = vunpack.c.h.b16 %v1342
    %v1476 = vunpack.c.l.b16 %v1343
    %v1477 = vunpack.c.h.b16 %v1343
    %v1478 = vunpack.c.l.b16 %v1344
    %v1479 = vunpack.c.h.b16 %v1344
    %v1480 = vunpack.c.l.b16 %v1345
    %v1481 = vunpack.c.h.b16 %v1345
    %v1482 = vunpack.c.l.b16 %v1346
    %v1483 = vunpack.c.h.b16 %v1346
    %v1484 = vunpack.c.l.b16 %v1347
    %v1485 = vunpack.c.h.b16 %v1347
    %v1486 = vunpack.c.l.b16 %v1348
    %v1487 = vunpack.c.h.b16 %v1348
    %v1488 = vunpack.c.l.b16 %v1349
    %v1489 = vunpack.c.h.b16 %v1349
    %v1490 = vunpack.c.l.b16 %v1350
    %v1491 = vunpack.c.h.b16 %v1350
    %v1492 = vunpack.c.l.b16 %v1351
    %v1493 = vunpack.c.h.b16 %v1351
    %v1494 = vunpack.c.l.b16 %v1352
    %v1495 = vunpack.c.h.b16 %v1352
    %v1496 = vunpack.c.l.b16 %v1353
    %v1497 = vunpack.c.h.b16 %v1353
    %v1498 = vunpack.c.l.b16 %v1354
    %v1499 = vunpack.c.h.b16 %v1354
    %v1500 = vunpack.c.l.b16 %v1355
    %v1501 = vunpack.c.h.b16 %v1355
    %v1502 = vunpack.c.l.b16 %v1356
    %v1503 = vunpack.c.h.b16 %v1356
    %v1504 = vunpack.c.l.b16 %v1357
    %v1505 = vunpack.c.h.b16 %v1357
    %v1506 = vunpack.c.l.b16 %v1358
    %v1507 = vunpack.c.h.b16 %v1358
    %v1508 = vunpack.c.l.b16 %v1359
    %v1509 = vunpack.c.h.b16 %v1359
    %v1510 = vunpack.c.l.b16 %v1360
    %v1511 = vunpack.c.h.b16 %v1360
    %v1512 = vunpack.c.l.b16 %v1361
    %v1513 = vunpack.c.h.b16 %v1361
    %v1514 = vunpack.c.l.b16 %v1362
    %v1515 = vunpack.c.h.b16 %v1362
    %v1516 = vunpack.c.l.b16 %v1363
    %v1517 = vunpack.c.h.b16 %v1363
    %v1518 = vunpack.c.l.b16 %v1364
    %v1519 = vunpack.c.h.b16 %v1364
    %v1520 = vunpack.c.l.b16 %v1365
    %v1521 = vunpack.c.h.b16 %v1365
    %v1522 = vunpack.c.l.b16 %v1366
    %v1523 = vunpack.c.h.b16 %v1366
    %v1524 = vunpack.c.l.b16 %v1367
    %v1525 = vunpack.c.h.b16 %v1367
    %v1526 = vunpack.c.l.b16 %v1368
    %v1527 = vunpack.c.h.b16 %v1368
    %v1528 = vunpack.c.l.b16 %v1369
    %v1529 = vunpack.c.h.b16 %v1369
    %v1530 = vunpack.c.l.b16 %v1370
    %v1531 = vunpack.c.h.b16 %v1370
    %v1532 = vunpack.c.l.b16 %v1371
    %v1533 = vunpack.c.h.b16 %v1371
    %v1534 = vunpack.c.l.b16 %v1372
    %v1535 = vunpack.c.h.b16 %v1372
    %v1536 = vunpack.c.l.b16 %v1373
    %v1537 = vunpack.c.h.b16 %v1373
    %v1538 = vunpack.c.l.b16 %v1374
    %v1539 = vunpack.c.h.b16 %v1374
    %v1540 = vunpack.c.l.b16 %v1375
    %v1541 = vunpack.c.h.b16 %v1375
    %v1542 = vunpack.c.l.b16 %v1376
    %v1543 = vunpack.c.h.b16 %v1376
    %v1544 = vunpack.c.l.b16 %v1377
    %v1545 = vunpack.c.h.b16 %v1377
    %v1546 = vunpack.c.l.b16 %v1378
    %v1547 = vunpack.c.h.b16 %v1378
    %v1548 = vunpack.c.l.b16 %v1379
    %v1549 = vunpack.c.h.b16 %v1379
    %v1550 = vunpack.c.l.b16 %v1380
    %v1551 = vunpack.c.h.b16 %v1380
    %v1552 = vunpack.c.l.b16 %v1381
    %v1553 = vunpack.c.h.b16 %v1381
    %v1554 = vunpack.c.l.b16 %v1382
    %v1555 = vunpack.c.h.b16 %v1382
    %v1556 = vunpack.c.l.b16 %v1383
    %v1557 = vunpack.c.h.b16 %v1383
    %v1558 = vunpack.c.l.b16 %v1384
    %v1559 = vunpack.c.h.b16 %v1384
    %v1560 = vunpack.c.l.b16 %v1385
    %v1561 = vunpack.c.h.b16 %v1385
    %v1562 = vunpack.c.l.b16 %v1386
    %v1563 = vunpack.c.h.b16 %v1386
    %v1564 = vunpack.c.l.b16 %v1387
    %v1565 = vunpack.c.h.b16 %v1387
    %v1566 = vunpack.c.l.b16 %v1388
    %v1567 = vunpack.c.h.b16 %v1388
    %v1568 = vunpack.c.l.b16 %v1389
    %v1569 = vunpack.c.h.b16 %v1389
    %v1570 = vunpack.c.l.b16 %v1390
    %v1571 = vunpack.c.h.b16 %v1390
    %v1572 = vunpack.c.l.b16 %v1391
    %v1573 = vunpack.c.h.b16 %v1391
    %v1574 = vunpack.c.l.b16 %v1392
    %v1575 = vunpack.c.h.b16 %v1392
    %v1576 = vunpack.c.l.b16 %v1393
    %v1577 = vunpack.c.h.b16 %v1393
    %v1578 = vunpack.c.l.b16 %v1394
    %v1579 = vunpack.c.h.b16 %v1394
    %v1580 = vunpack.c.l.b16 %v1395
    %v1581 = vunpack.c.h.b16 %v1395
    %v1582 = vunpack.c.l.b16 %v1396
    %v1583 = vunpack.c.h.b16 %v1396
    %v1584 = vunpack.c.l.b16 %v1397
    %v1585 = vunpack.c.h.b16 %v1397
    %v1586 = vunpack.c.l.b16 %v1398
    %v1587 = vunpack.c.h.b16 %v1398
    %v1588 = vunpack.c.l.b16 %v1399
    %v1589 = vunpack.c.h.b16 %v1399
    %v1590 = vunpack.c.l.b16 %v1400
    %v1591 = vunpack.c.h.b16 %v1400
    %v1592 = vunpack.c.l.b16 %v1401
    %v1593 = vunpack.c.h.b16 %v1401
    %v1594 = vpack.c.b16 %v1468, %v1466
    %v1595 = vpack.c.b16 %v1469, %v1467
    %v1596 = vpack.c.b16 %v1472, %v1470
    %v1597 = vpack.c.b16 %v1473, %v1471
    %v1598 = vpack.c.b16 %v1476, %v1474
    %v1599 = vpack.c.b16 %v1477, %v1475
    %v1600 = vpack.c.b16 %v1480, %v1478
    %v1601 = vpack.c.b16 %v1481, %v1479
    %v1602 = vpack.c.b16 %v1484, %v1482
    %v1603 = vpack.c.b16 %v1485, %v1483
    %v1604 = vpack.c.b16 %v1488, %v1486
    %v1605 = vpack.c.b16 %v1489, %v1487
    %v1606 = vpack.c.b16 %v1492, %v1490
    %v1607 = vpack.c.b16 %v1493, %v1491
    %v1608 = vpack.c.b16 %v1496, %v1494
    %v1609 = vpack.c.b16 %v1497, %v1495
    %v1610 = vpack.c.b16 %v1500, %v1498
    %v1611 = vpack.c.b16 %v1501, %v1499
    %v1612 = vpack.c.b16 %v1504, %v1502
    %v1613 = vpack.c.b16 %v1505, %v1503
    %v1614 = vpack.c.b16 %v1508, %v1506
    %v1615 = vpack.c.b16 %v1509, %v1507
    %v1616 = vpack.c.b16 %v1512, %v1510
    %v1617 = vpack.c.b16 %v1513, %v1511
    %v1618 = vpack.c.b16 %v1516, %v1514
    %v1619 = vpack.c.b16 %v1517, %v1515
    %v1620 = vpack.c.b16 %v1520, %v1518
    %v1621 = vpack.c.b16 %v1521, %v1519
    %v1622 = vpack.c.b16 %v1524, %v1522
    %v1623 = vpack.c.b16 %v1525, %v1523
    %v1624 = vpack.c.b16 %v1528, %v1526
    %v1625 = vpack.c.b16 %v1529, %v1527
    %v1626 = vpack.c.b16 %v1532, %v1530
    %v1627 = vpack.c.b16 %v1533, %v1531
    %v1628 = vpack.c.b16 %v1536, %v1534
    %v1629 = vpack.c.b16 %v1537, %v1535
    %v1630 = vpack.c.b16 %v1540, %v1538
    %v1631 = vpack.c.b16 %v1541, %v1539
    %v1632 = vpack.c.b16 %v1544, %v1542
    %v1633 = vpack.c.b16 %v1545, %v1543
    %v1634 = vpack.c.b16 %v1548, %v1546
    %v1635 = vpack.c.b16 %v1549, %v1547
    %v1636 = vpack.c.b16 %v1552, %v1550
    %v1637 = vpack.c.b16 %v1553, %v1551
    %v1638 = vpack.c.b16 %v1556, %v1554
    %v1639 = vpack.c.b16 %v1557, %v1555
    %v1640 = vpack.c.b16 %v1560, %v1558
    %v1641 = vpack.c.b16 %v1561, %v1559
    %v1642 = vpack.c.b16 %v1564, %v1562
    %v1643 = vpack.c.b16 %v1565, %v1563
    %v1644 = vpack.c.b16 %v1568, %v1566
    %v1645 = vpack.c.b16 %v1569, %v1567
    %v1646 = vpack.c.b16 %v1572, %v1570
    %v1647 = vpack.c.b16 %v1573, %v1571
    %v1648 = vpack.c.b16 %v1576, %v1574
    %v1649 = vpack.c.b16 %v1577, %v1575
    %v1650 = vpack.c.b16 %v1580, %v1578
    %v1651 = vpack.c.b16 %v1581, %v1579
    %v1652 = vpack.c.b16 %v1584, %v1582
    %v1653 = vpack.c.b16 %v1585, %v1583
    %v1654 = vpack.c.b16 %v1588, %v1586
    %v1655 = vpack.c.b16 %v1589, %v1587
    %v1656 = vpack.c.b16 %v1592, %v1590
    %v1657 = vpack.c.b16 %v1593, %v1591
    %1722 = vmatprep.subr.bf16.mxu0 %v1595
    %1723 = vmatpush1.bf16.msra.mxu0 %v1594
    %1724 = vmatprep.subr.bf16.mxu0 %v1597
    %1725 = vmatpush1.bf16.msra.mxu0 %v1596
    %1726 = vmatprep.subr.bf16.mxu0 %v1599
    %1727 = vmatpush1.bf16.msra.mxu0 %v1598
    %1728 = vmatprep.subr.bf16.mxu0 %v1601
    %1729 = vmatpush1.bf16.msra.mxu0 %v1600
    %1730 = vmatprep.subr.bf16.mxu0 %v1603
    %1731 = vmatpush1.bf16.msra.mxu0 %v1602
    %1732 = vmatprep.subr.bf16.mxu0 %v1605
    %1733 = vmatpush1.bf16.msra.mxu0 %v1604
    %1734 = vmatprep.subr.bf16.mxu0 %v1607
    %1735 = vmatpush1.bf16.msra.mxu0 %v1606
    %1736 = vmatprep.subr.bf16.mxu0 %v1609
    %1737 = vmatpush1.bf16.msra.mxu0 %v1608
    %1738 = vmatprep.subr.bf16.mxu0 %v1611
    %1739 = vmatpush1.bf16.msra.mxu0 %v1610
    %1740 = vmatprep.subr.bf16.mxu0 %v1613
    %1741 = vmatpush1.bf16.msra.mxu0 %v1612
    %1742 = vmatprep.subr.bf16.mxu0 %v1615
    %1743 = vmatpush1.bf16.msra.mxu0 %v1614
    %1744 = vmatprep.subr.bf16.mxu0 %v1617
    %1745 = vmatpush1.bf16.msra.mxu0 %v1616
    %1746 = vmatprep.subr.bf16.mxu0 %v1619
    %1747 = vmatpush1.bf16.msra.mxu0 %v1618
    %1748 = vmatprep.subr.bf16.mxu0 %v1621
    %1749 = vmatpush1.bf16.msra.mxu0 %v1620
    %1750 = vmatprep.subr.bf16.mxu0 %v1623
    %1751 = vmatpush1.bf16.msra.mxu0 %v1622
    %1752 = vmatprep.subr.bf16.mxu0 %v1625
    %1753 = vmatpush1.bf16.msra.mxu0 %v1624
    %1754 = vmatprep.mubr.bf16.mxu0 %v1275
    %1755 = vmatmul.mubr.bf16.gmra.mrb[0].mxu0 %v1274
    %v1756 = vpop.f32.mrb[0].mxu0
    %v1757 = vadd.f32 0.0, %v1756
    %v1758 = vpop.f32.mrb[0].mxu0
    %v1759 = vadd.f32 0.0, %v1758
    %v1760 = vpop.f32.mrb[0].mxu0
    %v1761 = vadd.f32 0.0, %v1760
    %v1762 = vpop.f32.mrb[0].mxu0
    %v1763 = vadd.f32 0.0, %v1762
    %1764 = vmatprep.mubr.bf16.mxu0 %v1279
    %1765 = vmatmul.mubr.bf16.gmra.mrb[0].mxu0 %v1278
    %v1766 = vpop.f32.mrb[0].mxu0
    %v1767 = vadd.f32 0.0, %v1766
    %v1768 = vpop.f32.mrb[0].mxu0
    %v1769 = vadd.f32 0.0, %v1768
    %v1770 = vpop.f32.mrb[0].mxu0
    %v1771 = vadd.f32 0.0, %v1770
    %v1772 = vpop.f32.mrb[0].mxu0
    %v1773 = vadd.f32 0.0, %v1772
    %1774 = vmatprep.mubr.bf16.mxu0 %v1283
    %1775 = vmatmul.mubr.bf16.gmra.mrb[0].mxu0 %v1282
    %v1776 = vpop.f32.mrb[0].mxu0
    %v1777 = vadd.f32 0.0, %v1776
    %v1778 = vpop.f32.mrb[0].mxu0
    %v1779 = vadd.f32 0.0, %v1778
    %v1780 = vpop.f32.mrb[0].mxu0
    %v1781 = vadd.f32 0.0, %v1780
    %v1782 = vpop.f32.mrb[0].mxu0
    %v1783 = vadd.f32 0.0, %v1782
    %1784 = vmatprep.mubr.bf16.mxu0 %v1287
    %1785 = vmatmul.mubr.bf16.gmra.mrb[0].mxu0 %v1286
    %v1786 = vpop.f32.mrb[0].mxu0
    %v1787 = vadd.f32 0.0, %v1786
    %v1788 = vpop.f32.mrb[0].mxu0
    %v1789 = vadd.f32 0.0, %v1788
    %v1790 = vpop.f32.mrb[0].mxu0
    %v1791 = vadd.f32 0.0, %v1790
    %v1792 = vpop.f32.mrb[0].mxu0
    %v1793 = vadd.f32 0.0, %v1792
    %1794 = vmatprep.mubr.bf16.mxu0 %v1291
    %1795 = vmatmul.mubr.bf16.gmra.mrb[0].mxu0 %v1290
    %v1796 = vpop.f32.mrb[0].mxu0
    %v1797 = vadd.f32 0.0, %v1796
    %v1798 = vpop.f32.mrb[0].mxu0
    %v1799 = vadd.f32 0.0, %v1798
    %v1800 = vpop.f32.mrb[0].mxu0
    %v1801 = vadd.f32 0.0, %v1800
    %v1802 = vpop.f32.mrb[0].mxu0
    %v1803 = vadd.f32 0.0, %v1802
    %1804 = vmatprep.mubr.bf16.mxu0 %v1295
    %1805 = vmatmul.mubr.bf16.gmra.mrb[0].mxu0 %v1294
    %v1806 = vpop.f32.mrb[0].mxu0
    %v1807 = vadd.f32 0.0, %v1806
    %v1808 = vpop.f32.mrb[0].mxu0
    %v1809 = vadd.f32 0.0, %v1808
    %v1810 = vpop.f32.mrb[0].mxu0
    %v1811 = vadd.f32 0.0, %v1810
    %v1812 = vpop.f32.mrb[0].mxu0
    %v1813 = vadd.f32 0.0, %v1812
    %1814 = vmatprep.mubr.bf16.mxu0 %v1299
    %1815 = vmatmul.mubr.bf16.gmra.mrb[0].mxu0 %v1298
    %v1816 = vpop.f32.mrb[0].mxu0
    %v1817 = vadd.f32 0.0, %v1816
    %v1818 = vpop.f32.mrb[0].mxu0
    %v1819 = vadd.f32 0.0, %v1818
    %v1820 = vpop.f32.mrb[0].mxu0
    %v1821 = vadd.f32 0.0, %v1820
    %v1822 = vpop.f32.mrb[0].mxu0
    %v1823 = vadd.f32 0.0, %v1822
    %1824 = vmatprep.mubr.bf16.mxu0 %v1303
    %1825 = vmatmul.mubr.bf16.gmra.mrb[0].mxu0 %v1302
    %v1826 = vpop.f32.mrb[0].mxu0
    %v1827 = vadd.f32 0.0, %v1826
    %v1828 = vpop.f32.mrb[0].mxu0
    %v1829 = vadd.f32 0.0, %v1828
    %v1830 = vpop.f32.mrb[0].mxu0
    %v1831 = vadd.f32 0.0, %v1830
    %v1832 = vpop.f32.mrb[0].mxu0
    %v1833 = vadd.f32 0.0, %v1832
    %1834 = vmatprep.mubr.bf16.mxu0 %v1307
    %1835 = vmatmul.mubr.bf16.gmra.mrb[0].mxu0 %v1306
    %v1836 = vpop.f32.mrb[0].mxu0
    %v1837 = vadd.f32 0.0, %v1836
    %v1838 = vpop.f32.mrb[0].mxu0
    %v1839 = vadd.f32 0.0, %v1838
    %v1840 = vpop.f32.mrb[0].mxu0
    %v1841 = vadd.f32 0.0, %v1840
    %v1842 = vpop.f32.mrb[0].mxu0
    %v1843 = vadd.f32 0.0, %v1842
    %1844 = vmatprep.mubr.bf16.mxu0 %v1311
    %1845 = vmatmul.mubr.bf16.gmra.mrb[0].mxu0 %v1310
    %v1846 = vpop.f32.mrb[0].mxu0
    %v1847 = vadd.f32 0.0, %v1846
    %v1848 = vpop.f32.mrb[0].mxu0
    %v1849 = vadd.f32 0.0, %v1848
    %v1850 = vpop.f32.mrb[0].mxu0
    %v1851 = vadd.f32 0.0, %v1850
    %v1852 = vpop.f32.mrb[0].mxu0
    %v1853 = vadd.f32 0.0, %v1852
    %1854 = vmatprep.mubr.bf16.mxu0 %v1315
    %1855 = vmatmul.mubr.bf16.gmra.mrb[0].mxu0 %v1314
    %v1856 = vpop.f32.mrb[0].mxu0
    %v1857 = vadd.f32 0.0, %v1856
    %v1858 = vpop.f32.mrb[0].mxu0
    %v1859 = vadd.f32 0.0, %v1858
    %v1860 = vpop.f32.mrb[0].mxu0
    %v1861 = vadd.f32 0.0, %v1860
    %v1862 = vpop.f32.mrb[0].mxu0
    %v1863 = vadd.f32 0.0, %v1862
    %1864 = vmatprep.mubr.bf16.mxu0 %v1319
    %1865 = vmatmul.mubr.bf16.gmra.mrb[0].mxu0 %v1318
    %v1866 = vpop.f32.mrb[0].mxu0
    %v1867 = vadd.f32 0.0, %v1866
    %v1868 = vpop.f32.mrb[0].mxu0
    %v1869 = vadd.f32 0.0, %v1868
    %v1870 = vpop.f32.mrb[0].mxu0
    %v1871 = vadd.f32 0.0, %v1870
    %v1872 = vpop.f32.mrb[0].mxu0
    %v1873 = vadd.f32 0.0, %v1872
    %1874 = vmatprep.mubr.bf16.mxu0 %v1323
    %1875 = vmatmul.mubr.bf16.gmra.mrb[0].mxu0 %v1322
    %v1876 = vpop.f32.mrb[0].mxu0
    %v1877 = vadd.f32 0.0, %v1876
    %v1878 = vpop.f32.mrb[0].mxu0
    %v1879 = vadd.f32 0.0, %v1878
    %v1880 = vpop.f32.mrb[0].mxu0
    %v1881 = vadd.f32 0.0, %v1880
    %v1882 = vpop.f32.mrb[0].mxu0
    %v1883 = vadd.f32 0.0, %v1882
    %1884 = vmatprep.mubr.bf16.mxu0 %v1327
    %1885 = vmatmul.mubr.bf16.gmra.mrb[0].mxu0 %v1326
    %v1886 = vpop.f32.mrb[0].mxu0
    %v1887 = vadd.f32 0.0, %v1886
    %v1888 = vpop.f32.mrb[0].mxu0
    %v1889 = vadd.f32 0.0, %v1888
    %v1890 = vpop.f32.mrb[0].mxu0
    %v1891 = vadd.f32 0.0, %v1890
    %v1892 = vpop.f32.mrb[0].mxu0
    %v1893 = vadd.f32 0.0, %v1892
    %1894 = vmatprep.mubr.bf16.mxu0 %v1331
    %1895 = vmatmul.mubr.bf16.gmra.mrb[0].mxu0 %v1330
    %v1896 = vpop.f32.mrb[0].mxu0
    %v1897 = vadd.f32 0.0, %v1896
    %v1898 = vpop.f32.mrb[0].mxu0
    %v1899 = vadd.f32 0.0, %v1898
    %v1900 = vpop.f32.mrb[0].mxu0
    %v1901 = vadd.f32 0.0, %v1900
    %v1902 = vpop.f32.mrb[0].mxu0
    %v1903 = vadd.f32 0.0, %v1902
    %1904 = vmatprep.mubr.bf16.mxu0 %v1335
    %1905 = vmatmul.mubr.bf16.gmra.mrb[0].mxu0 %v1334
    %v1906 = vpop.f32.mrb[0].mxu0
    %v1907 = vadd.f32 0.0, %v1906
    %v1908 = vpop.f32.mrb[0].mxu0
    %v1909 = vadd.f32 0.0, %v1908
    %v1910 = vpop.f32.mrb[0].mxu0
    %v1911 = vadd.f32 0.0, %v1910
    %v1912 = vpop.f32.mrb[0].mxu0
    %v1913 = vadd.f32 0.0, %v1912
    %1914 = vdwg.mxu0
    %1915 = vmatprep.subr.bf16.mxu0 %v1627
    %1916 = vmatpush1.bf16.msra.mxu0 %v1626
    %1917 = vmatprep.subr.bf16.mxu0 %v1629
    %1918 = vmatpush1.bf16.msra.mxu0 %v1628
    %1919 = vmatprep.subr.bf16.mxu0 %v1631
    %1920 = vmatpush1.bf16.msra.mxu0 %v1630
    %1921 = vmatprep.subr.bf16.mxu0 %v1633
    %1922 = vmatpush1.bf16.msra.mxu0 %v1632
    %1923 = vmatprep.subr.bf16.mxu0 %v1635
    %1924 = vmatpush1.bf16.msra.mxu0 %v1634
    %1925 = vmatprep.subr.bf16.mxu0 %v1637
    %1926 = vmatpush1.bf16.msra.mxu0 %v1636
    %1927 = vmatprep.subr.bf16.mxu0 %v1639
    %1928 = vmatpush1.bf16.msra.mxu0 %v1638
    %1929 = vmatprep.subr.bf16.mxu0 %v1641
    %1930 = vmatpush1.bf16.msra.mxu0 %v1640
    %1931 = vmatprep.subr.bf16.mxu0 %v1643
    %1932 = vmatpush1.bf16.msra.mxu0 %v1642
    %1933 = vmatprep.subr.bf16.mxu0 %v1645
    %1934 = vmatpush1.bf16.msra.mxu0 %v1644
    %1935 = vmatprep.subr.bf16.mxu0 %v1647
    %1936 = vmatpush1.bf16.msra.mxu0 %v1646
    %1937 = vmatprep.subr.bf16.mxu0 %v1649
    %1938 = vmatpush1.bf16.msra.mxu0 %v1648
    %1939 = vmatprep.subr.bf16.mxu0 %v1651
    %1940 = vmatpush1.bf16.msra.mxu0 %v1650
    %1941 = vmatprep.subr.bf16.mxu0 %v1653
    %1942 = vmatpush1.bf16.msra.mxu0 %v1652
    %1943 = vmatprep.subr.bf16.mxu0 %v1655
    %1944 = vmatpush1.bf16.msra.mxu0 %v1654
    %1945 = vmatprep.subr.bf16.mxu0 %v1657
    %1946 = vmatpush1.bf16.msra.mxu0 %v1656
    %1947 = vmatprep.mubr.bf16.mxu0 %v1277
    %1948 = vmatmul.mubr.bf16.gmra.mrb[0].mxu0 %v1276
    %v1949 = vpop.f32.mrb[0].mxu0
    %v1950 = vadd.f32 %v1757, %v1949
    %v1951 = vpop.f32.mrb[0].mxu0
    %v1952 = vadd.f32 %v1759, %v1951
    %v1953 = vpop.f32.mrb[0].mxu0
    %v1954 = vadd.f32 %v1761, %v1953
    %v1955 = vpop.f32.mrb[0].mxu0
    %v1956 = vadd.f32 %v1763, %v1955
    %1957 = vmatprep.mubr.bf16.mxu0 %v1281
    %1958 = vmatmul.mubr.bf16.gmra.mrb[0].mxu0 %v1280
    %v1959 = vpop.f32.mrb[0].mxu0
    %v1960 = vadd.f32 %v1767, %v1959
    %v1961 = vpop.f32.mrb[0].mxu0
    %v1962 = vadd.f32 %v1769, %v1961
    %v1963 = vpop.f32.mrb[0].mxu0
    %v1964 = vadd.f32 %v1771, %v1963
    %v1965 = vpop.f32.mrb[0].mxu0
    %v1966 = vadd.f32 %v1773, %v1965
    %1967 = vmatprep.mubr.bf16.mxu0 %v1285
    %1968 = vmatmul.mubr.bf16.gmra.mrb[0].mxu0 %v1284
    %v1969 = vpop.f32.mrb[0].mxu0
    %v1970 = vadd.f32 %v1777, %v1969
    %v1971 = vpop.f32.mrb[0].mxu0
    %v1972 = vadd.f32 %v1779, %v1971
    %v1973 = vpop.f32.mrb[0].mxu0
    %v1974 = vadd.f32 %v1781, %v1973
    %v1975 = vpop.f32.mrb[0].mxu0
    %v1976 = vadd.f32 %v1783, %v1975
    %1977 = vmatprep.mubr.bf16.mxu0 %v1289
    %1978 = vmatmul.mubr.bf16.gmra.mrb[0].mxu0 %v1288
    %v1979 = vpop.f32.mrb[0].mxu0
    %v1980 = vadd.f32 %v1787, %v1979
    %v1981 = vpop.f32.mrb[0].mxu0
    %v1982 = vadd.f32 %v1789, %v1981
    %v1983 = vpop.f32.mrb[0].mxu0
    %v1984 = vadd.f32 %v1791, %v1983
    %v1985 = vpop.f32.mrb[0].mxu0
    %v1986 = vadd.f32 %v1793, %v1985
    %1987 = vmatprep.mubr.bf16.mxu0 %v1293
    %1988 = vmatmul.mubr.bf16.gmra.mrb[0].mxu0 %v1292
    %v1989 = vpop.f32.mrb[0].mxu0
    %v1990 = vadd.f32 %v1797, %v1989
    %v1991 = vpop.f32.mrb[0].mxu0
    %v1992 = vadd.f32 %v1799, %v1991
    %v1993 = vpop.f32.mrb[0].mxu0
    %v1994 = vadd.f32 %v1801, %v1993
    %v1995 = vpop.f32.mrb[0].mxu0
    %v1996 = vadd.f32 %v1803, %v1995
    %1997 = vmatprep.mubr.bf16.mxu0 %v1297
    %1998 = vmatmul.mubr.bf16.gmra.mrb[0].mxu0 %v1296
    %v1999 = vpop.f32.mrb[0].mxu0
    %v2000 = vadd.f32 %v1807, %v1999
    %v2001 = vpop.f32.mrb[0].mxu0
    %v2002 = vadd.f32 %v1809, %v2001
    %v2003 = vpop.f32.mrb[0].mxu0
    %v2004 = vadd.f32 %v1811, %v2003
    %v2005 = vpop.f32.mrb[0].mxu0
    %v2006 = vadd.f32 %v1813, %v2005
    %2007 = vmatprep.mubr.bf16.mxu0 %v1301
    %2008 = vmatmul.mubr.bf16.gmra.mrb[0].mxu0 %v1300
    %v2009 = vpop.f32.mrb[0].mxu0
    %v2010 = vadd.f32 %v1817, %v2009
    %v2011 = vpop.f32.mrb[0].mxu0
    %v2012 = vadd.f32 %v1819, %v2011
    %v2013 = vpop.f32.mrb[0].mxu0
    %v2014 = vadd.f32 %v1821, %v2013
    %v2015 = vpop.f32.mrb[0].mxu0
    %v2016 = vadd.f32 %v1823, %v2015
    %2017 = vmatprep.mubr.bf16.mxu0 %v1305
    %2018 = vmatmul.mubr.bf16.gmra.mrb[0].mxu0 %v1304
    %v2019 = vpop.f32.mrb[0].mxu0
    %v2020 = vadd.f32 %v1827, %v2019
    %v2021 = vpop.f32.mrb[0].mxu0
    %v2022 = vadd.f32 %v1829, %v2021
    %v2023 = vpop.f32.mrb[0].mxu0
    %v2024 = vadd.f32 %v1831, %v2023
    %v2025 = vpop.f32.mrb[0].mxu0
    %v2026 = vadd.f32 %v1833, %v2025
    %2027 = vmatprep.mubr.bf16.mxu0 %v1309
    %2028 = vmatmul.mubr.bf16.gmra.mrb[0].mxu0 %v1308
    %v2029 = vpop.f32.mrb[0].mxu0
    %v2030 = vadd.f32 %v1837, %v2029
    %v2031 = vpop.f32.mrb[0].mxu0
    %v2032 = vadd.f32 %v1839, %v2031
    %v2033 = vpop.f32.mrb[0].mxu0
    %v2034 = vadd.f32 %v1841, %v2033
    %v2035 = vpop.f32.mrb[0].mxu0
    %v2036 = vadd.f32 %v1843, %v2035
    %2037 = vmatprep.mubr.bf16.mxu0 %v1313
    %2038 = vmatmul.mubr.bf16.gmra.mrb[0].mxu0 %v1312
    %v2039 = vpop.f32.mrb[0].mxu0
    %v2040 = vadd.f32 %v1847, %v2039
    %v2041 = vpop.f32.mrb[0].mxu0
    %v2042 = vadd.f32 %v1849, %v2041
    %v2043 = vpop.f32.mrb[0].mxu0
    %v2044 = vadd.f32 %v1851, %v2043
    %v2045 = vpop.f32.mrb[0].mxu0
    %v2046 = vadd.f32 %v1853, %v2045
    %2047 = vmatprep.mubr.bf16.mxu0 %v1317
    %2048 = vmatmul.mubr.bf16.gmra.mrb[0].mxu0 %v1316
    %v2049 = vpop.f32.mrb[0].mxu0
    %v2050 = vadd.f32 %v1857, %v2049
    %v2051 = vpop.f32.mrb[0].mxu0
    %v2052 = vadd.f32 %v1859, %v2051
    %v2053 = vpop.f32.mrb[0].mxu0
    %v2054 = vadd.f32 %v1861, %v2053
    %v2055 = vpop.f32.mrb[0].mxu0
    %v2056 = vadd.f32 %v1863, %v2055
    %2057 = vmatprep.mubr.bf16.mxu0 %v1321
    %2058 = vmatmul.mubr.bf16.gmra.mrb[0].mxu0 %v1320
    %v2059 = vpop.f32.mrb[0].mxu0
    %v2060 = vadd.f32 %v1867, %v2059
    %v2061 = vpop.f32.mrb[0].mxu0
    %v2062 = vadd.f32 %v1869, %v2061
    %v2063 = vpop.f32.mrb[0].mxu0
    %v2064 = vadd.f32 %v1871, %v2063
    %v2065 = vpop.f32.mrb[0].mxu0
    %v2066 = vadd.f32 %v1873, %v2065
    %2067 = vmatprep.mubr.bf16.mxu0 %v1325
    %2068 = vmatmul.mubr.bf16.gmra.mrb[0].mxu0 %v1324
    %v2069 = vpop.f32.mrb[0].mxu0
    %v2070 = vadd.f32 %v1877, %v2069
    %v2071 = vpop.f32.mrb[0].mxu0
    %v2072 = vadd.f32 %v1879, %v2071
    %v2073 = vpop.f32.mrb[0].mxu0
    %v2074 = vadd.f32 %v1881, %v2073
    %v2075 = vpop.f32.mrb[0].mxu0
    %v2076 = vadd.f32 %v1883, %v2075
    %2077 = vmatprep.mubr.bf16.mxu0 %v1329
    %2078 = vmatmul.mubr.bf16.gmra.mrb[0].mxu0 %v1328
    %v2079 = vpop.f32.mrb[0].mxu0
    %v2080 = vadd.f32 %v1887, %v2079
    %v2081 = vpop.f32.mrb[0].mxu0
    %v2082 = vadd.f32 %v1889, %v2081
    %v2083 = vpop.f32.mrb[0].mxu0
    %v2084 = vadd.f32 %v1891, %v2083
    %v2085 = vpop.f32.mrb[0].mxu0
    %v2086 = vadd.f32 %v1893, %v2085
    %2087 = vmatprep.mubr.bf16.mxu0 %v1333
    %2088 = vmatmul.mubr.bf16.gmra.mrb[0].mxu0 %v1332
    %v2089 = vpop.f32.mrb[0].mxu0
    %v2090 = vadd.f32 %v1897, %v2089
    %v2091 = vpop.f32.mrb[0].mxu0
    %v2092 = vadd.f32 %v1899, %v2091
    %v2093 = vpop.f32.mrb[0].mxu0
    %v2094 = vadd.f32 %v1901, %v2093
    %v2095 = vpop.f32.mrb[0].mxu0
    %v2096 = vadd.f32 %v1903, %v2095
    %2097 = vmatprep.mubr.bf16.mxu0 %v1337
    %2098 = vmatmul.mubr.bf16.gmra.mrb[0].mxu0 %v1336
    %v2099 = vpop.f32.mrb[0].mxu0
    %v2100 = vadd.f32 %v1907, %v2099
    %v2101 = vpop.f32.mrb[0].mxu0
    %v2102 = vadd.f32 %v1909, %v2101
    %v2103 = vpop.f32.mrb[0].mxu0
    %v2104 = vadd.f32 %v1911, %v2103
    %v2105 = vpop.f32.mrb[0].mxu0
    %v2106 = vadd.f32 %v1913, %v2105
    %2107 = vdwg.mxu0
    %2108 = vst [vmem:[#allocation8] sm:$0xff] %v1950
    %2109 = vst [vmem:[#allocation8 + $0x8] sm:$0xff] %v1952
    %2110 = vst [vmem:[#allocation8 + $0x10] sm:$0xff] %v1954
    %2111 = vst [vmem:[#allocation8 + $0x18] sm:$0xff] %v1956
    %2112 = vst [vmem:[#allocation8 + $0x20] sm:$0xff] %v1960
    %2113 = vst [vmem:[#allocation8 + $0x28] sm:$0xff] %v1962
    %2114 = vst [vmem:[#allocation8 + $0x30] sm:$0xff] %v1964
    %2115 = vst [vmem:[#allocation8 + $0x38] sm:$0xff] %v1966
    %2116 = vst [vmem:[#allocation8 + $0x40] sm:$0xff] %v1970
    %2117 = vst [vmem:[#allocation8 + $0x48] sm:$0xff] %v1972
    %2118 = vst [vmem:[#allocation8 + $0x50] sm:$0xff] %v1974
    %2119 = vst [vmem:[#allocation8 + $0x58] sm:$0xff] %v1976
    %2120 = vst [vmem:[#allocation8 + $0x60] sm:$0xff] %v1980
    %2121 = vst [vmem:[#allocation8 + $0x68] sm:$0xff] %v1982
    %2122 = vst [vmem:[#allocation8 + $0x70] sm:$0xff] %v1984
    %2123 = vst [vmem:[#allocation8 + $0x78] sm:$0xff] %v1986
    %2124 = vst [vmem:[#allocation8 + $0x80] sm:$0xff] %v1990
    %2125 = vst [vmem:[#allocation8 + $0x88] sm:$0xff] %v1992
    %2126 = vst [vmem:[#allocation8 + $0x90] sm:$0xff] %v1994
    %2127 = vst [vmem:[#allocation8 + $0x98] sm:$0xff] %v1996
    %2128 = vst [vmem:[#allocation8 + $0xa0] sm:$0xff] %v2000
    %2129 = vst [vmem:[#allocation8 + $0xa8] sm:$0xff] %v2002
    %2130 = vst [vmem:[#allocation8 + $0xb0] sm:$0xff] %v2004
    %2131 = vst [vmem:[#allocation8 + $0xb8] sm:$0xff] %v2006
    %2132 = vst [vmem:[#allocation8 + $0xc0] sm:$0xff] %v2010
    %2133 = vst [vmem:[#allocation8 + $0xc8] sm:$0xff] %v2012
    %2134 = vst [vmem:[#allocation8 + $0xd0] sm:$0xff] %v2014
    %2135 = vst [vmem:[#allocation8 + $0xd8] sm:$0xff] %v2016
    %2136 = vst [vmem:[#allocation8 + $0xe0] sm:$0xff] %v2020
    %2137 = vst [vmem:[#allocation8 + $0xe8] sm:$0xff] %v2022
    %2138 = vst [vmem:[#allocation8 + $0xf0] sm:$0xff] %v2024
    %2139 = vst [vmem:[#allocation8 + $0xf8] sm:$0xff] %v2026
    %2140 = vst [vmem:[#allocation8 + $0x100] sm:$0xff] %v2030
    %2141 = vst [vmem:[#allocation8 + $0x108] sm:$0xff] %v2032
    %2142 = vst [vmem:[#allocation8 + $0x110] sm:$0xff] %v2034
    %2143 = vst [vmem:[#allocation8 + $0x118] sm:$0xff] %v2036
    %2144 = vst [vmem:[#allocation8 + $0x120] sm:$0xff] %v2040
    %2145 = vst [vmem:[#allocation8 + $0x128] sm:$0xff] %v2042
    %2146 = vst [vmem:[#allocation8 + $0x130] sm:$0xff] %v2044
    %2147 = vst [vmem:[#allocation8 + $0x138] sm:$0xff] %v2046
    %2148 = vst [vmem:[#allocation8 + $0x140] sm:$0xff] %v2050
    %2149 = vst [vmem:[#allocation8 + $0x148] sm:$0xff] %v2052
    %2150 = vst [vmem:[#allocation8 + $0x150] sm:$0xff] %v2054
    %2151 = vst [vmem:[#allocation8 + $0x158] sm:$0xff] %v2056
    %2152 = vst [vmem:[#allocation8 + $0x160] sm:$0xff] %v2060
    %2153 = vst [vmem:[#allocation8 + $0x168] sm:$0xff] %v2062
    %2154 = vst [vmem:[#allocation8 + $0x170] sm:$0xff] %v2064
    %2155 = vst [vmem:[#allocation8 + $0x178] sm:$0xff] %v2066
    %2156 = vst [vmem:[#allocation8 + $0x180] sm:$0xff] %v2070
    %2157 = vst [vmem:[#allocation8 + $0x188] sm:$0xff] %v2072
    %2158 = vst [vmem:[#allocation8 + $0x190] sm:$0xff] %v2074
    %2159 = vst [vmem:[#allocation8 + $0x198] sm:$0xff] %v2076
    %2160 = vst [vmem:[#allocation8 + $0x1a0] sm:$0xff] %v2080
    %2161 = vst [vmem:[#allocation8 + $0x1a8] sm:$0xff] %v2082
    %2162 = vst [vmem:[#allocation8 + $0x1b0] sm:$0xff] %v2084
    %2163 = vst [vmem:[#allocation8 + $0x1b8] sm:$0xff] %v2086
    %2164 = vst [vmem:[#allocation8 + $0x1c0] sm:$0xff] %v2090
    %2165 = vst [vmem:[#allocation8 + $0x1c8] sm:$0xff] %v2092
    %2166 = vst [vmem:[#allocation8 + $0x1d0] sm:$0xff] %v2094
    %2167 = vst [vmem:[#allocation8 + $0x1d8] sm:$0xff] %v2096
    %2168 = vst [vmem:[#allocation8 + $0x1e0] sm:$0xff] %v2100
    %2169 = vst [vmem:[#allocation8 + $0x1e8] sm:$0xff] %v2102
    %2170 = vst [vmem:[#allocation8 + $0x1f0] sm:$0xff] %v2104
    %2171 = vst [vmem:[#allocation8 + $0x1f8] sm:$0xff] %v2106
    // Predicated region
    $region26: #{tpu_custom_call.1} parent=1 // pred_check
      _
    $region27: #{tpu_custom_call.1} parent=1 // pred_check_branch
      %2173 = sbr.rel (0) target = $region29
    $region28: #{tpu_custom_call.1} parent=1 // pred_region
      %s2175 = ssub.s32 8192, 8192
      %2176 = vsyncadd [#allocation4], %s2175
      %s2177 = sshll.u32 [#allocation8], 4
      %s2178 = int_to_ptr.vmem [resolvable:$true] %s2177
      %2183 = dma.vmem_to_hbm [thread:$0]  %s2178, 8192, %s3, [#allocation4], 256, 256, 16
    $region29: #{tpu_custom_call.1} parent=1 // pred_fallthru
      _
    // Predicated region
    $region30: #{tpu_custom_call.1} parent=1 // pred_check
      _
    $region31: #{tpu_custom_call.1} parent=1 // pred_check_branch
      %2185 = sbr.rel (0) target = $region33
    $region32: #{tpu_custom_call.1} parent=1 // pred_region
      %2186 = dma.done [#allocation4], 8192
    $region33: #{tpu_custom_call.1} parent=1 // pred_fallthru
      _
    %2187 = vsyncpa [#allocation3], 1
    %2188 = vsyncpa [#allocation6], 1
    %2189 = vsyncpa [#allocation4], 1

</llo_original>
